<compile_context>
chip_gen: v7x
topology: tpu7x:2x2x1
jax: 0.10.0
libtpu: 0.0.40
codegen_flags: <defaults>
</compile_context>

<pallas_src>
import functools

import jax
import jax.numpy as jnp
from jax.experimental import pallas as pl
from jax.experimental.pallas import tpu as pltpu

LANE = 128
NEG_INF = jnp.float32(-1e30)


def _round_up(n, m):
    return ((n + m - 1) // m) * m


def _pad_to(a, rows, cols, value=0.0):
    r, c = a.shape
    return jnp.pad(a, ((0, rows - r), (0, cols - c)), constant_values=value)


# ---------------------------------------------------------------------------
# One-time parameter preparation (padding / casting hoisted out of the hot path)
# ---------------------------------------------------------------------------
def prepare_params(params, use_bf16=False):
    """Pad every layer width up to a 128-lane multiple and bake the softmax
    padded-lane mask into b4 (padded lanes = -1e30, kept in f32)."""
    w1, b1, w2, b2, w3, b3, w4, b4 = params
    d_in, h1 = w1.shape
    h2, h3, out_size = w2.shape[1], w3.shape[1], w4.shape[1]

    d_in_p = _round_up(d_in, LANE)
    h1p, h2p, h3p, outp = (_round_up(d, LANE) for d in (h1, h2, h3, out_size))

    wdt = jnp.bfloat16 if use_bf16 else jnp.float32
    w1p = _pad_to(w1, d_in_p, h1p).astype(wdt)
    w2p = _pad_to(w2, h1p, h2p).astype(wdt)
    w3p = _pad_to(w3, h2p, h3p).astype(wdt)
    w4p = _pad_to(w4, h3p, outp).astype(wdt)
    # Biases stay f32.  Padded hidden lanes: zero bias -> relu(0)=0, and the
    # next layer's padded weight rows are zero, so padding is semantically inert.
    b1p = _pad_to(b1, 1, h1p)
    b2p = _pad_to(b2, 1, h2p)
    b3p = _pad_to(b3, 1, h3p)
    # fc4 padded lanes get -1e30: padded weight columns are zero, so those
    # logits become -1e30 and exp underflows to exactly 0 in the softmax.
    b4p = _pad_to(b4, 1, outp, value=-1e30)

    padded = (w1p, b1p, w2p, b2p, w3p, b3p, w4p, b4p)
    meta = dict(d_in=d_in, d_in_p=d_in_p, out_size=out_size, out_p=outp,
                use_bf16=use_bf16)
    return padded, meta


# ---------------------------------------------------------------------------
# Kernel: fully fused 4-layer MLP + softmax on one batch tile
# ---------------------------------------------------------------------------
def _mlp_kernel(x_ref,
                w1_ref, b1_ref,
                w2_ref, b2_ref,
                w3_ref, b3_ref,
                w4_ref, b4_ref,
                out_ref,
                *, compute_dtype):
    x = x_ref[...]
    if x.dtype != compute_dtype:
        x = x.astype(compute_dtype)

    def dense(h, w_ref, b_ref):
        if h.dtype != compute_dtype:
            h = h.astype(compute_dtype)
        return jnp.dot(h, w_ref[...], preferred_element_type=jnp.float32) \
            + b_ref[...]

    h = jnp.maximum(dense(x, w1_ref, b1_ref), 0.0)
    h = jnp.maximum(dense(h, w2_ref, b2_ref), 0.0)
    h = jnp.maximum(dense(h, w3_ref, b3_ref), 0.0)
    logits = dense(h, w4_ref, b4_ref)          # padded lanes already at -1e30

    # Softmax (padded lanes underflow to exactly 0 via the baked-in -1e30 bias).
    m = jnp.max(logits, axis=-1, keepdims=True)
    e = jnp.exp(logits - m)
    denom = jnp.sum(e, axis=-1, keepdims=True)
    out_ref[...] = (e / denom).astype(out_ref.dtype)   # exact normalization


# ---------------------------------------------------------------------------
# Wrapper
# ---------------------------------------------------------------------------
def _pick_block_b(batch):
    """Few, fat grid steps: one step on single-TC chips; even 2-way split on
    v7x (2 TensorCores).  Capped at 512 rows per step to avoid vreg spills."""
    bp8 = _round_up(max(batch, 1), 8)
    try:
        kind = jax.devices()[0].device_kind.lower()
    except Exception:  # pragma: no cover
        kind = ""
    n_tc = 2 if "v7" in kind else 1
    blk = _round_up(pl.cdiv(bp8, n_tc), 8)
    return min(blk, 512)


@functools.partial(jax.jit,
                   static_argnames=("block_b", "d_in_p", "out_size", "use_bf16"))
def _mlp_forward_jit(x, padded, *, block_b, d_in_p, out_size, use_bf16):
    w1p, b1p, w2p, b2p, w3p, b3p, w4p, b4p = padded
    B, D_in = x.shape
    outp = w4p.shape[1]

    # Pad batch to a block multiple and input dim to 128 lanes in one op.
    Bp = _round_up(B, block_b)
    xp = jnp.pad(x, ((0, Bp - B), (0, d_in_p - D_in)))

    grid = (Bp // block_b,)
    compute_dtype = jnp.bfloat16 if use_bf16 else jnp.float32
    kernel = functools.partial(_mlp_kernel, compute_dtype=compute_dtype)

    def full_spec(shape):
        # Constant index_map -> block stays resident in VMEM across grid steps.
        return pl.BlockSpec(shape, lambda i: (0,) * len(shape))

    h1p, h2p, h3p = w1p.shape[1], w2p.shape[1], w3p.shape[1]
    flops = 2 * Bp * (d_in_p * h1p + h1p * h2p + h2p * h3p + h3p * outp)
    weight_bytes = sum(int(a.size) * a.dtype.itemsize for a in padded)
    bytes_accessed = 4 * Bp * d_in_p + weight_bytes + 4 * Bp * outp

    out = pl.pallas_call(
        kernel,
        out_shape=jax.ShapeDtypeStruct((Bp, outp), jnp.float32),
        grid_spec=pltpu.PrefetchScalarGridSpec(
            num_scalar_prefetch=0,
            grid=grid,
            in_specs=[
                pl.BlockSpec((block_b, d_in_p), lambda i: (i, 0)),   # x tile
                full_spec(w1p.shape), full_spec(b1p.shape),
                full_spec(w2p.shape), full_spec(b2p.shape),
                full_spec(w3p.shape), full_spec(b3p.shape),
                full_spec(w4p.shape), full_spec(b4p.shape),
            ],
            out_specs=pl.BlockSpec((block_b, outp), lambda i: (i, 0)),
        ),
        compiler_params=pltpu.CompilerParams(
            dimension_semantics=("parallel",)),
        cost_estimate=pl.CostEstimate(
            flops=flops,
            transcendentals=Bp * outp,
            bytes_accessed=bytes_accessed),
    )(xp, w1p, b1p, w2p, b2p, w3p, b3p, w4p, b4p)

    return out[:B, :out_size]


def mlp_forward(x, prepared, block_b=None):
    padded, meta = prepared
    if block_b is None:
        block_b = _pick_block_b(x.shape[0])
    return _mlp_forward_jit(x, padded,
                            block_b=block_b,
                            d_in_p=meta["d_in_p"],
                            out_size=meta["out_size"],
                            use_bf16=meta["use_bf16"])


# ---------------------------------------------------------------------------
# Reference / init
# ---------------------------------------------------------------------------
def init_params(key, input_size, h1, h2, h3, output_size):
    """Deterministic init mimicking nn.Linear's uniform(-1/sqrt(fan_in), ...).
    Weights stored as (in_features, out_features)."""
    dims = [(input_size, h1), (h1, h2), (h2, h3), (h3, output_size)]
    params = []
    for fan_in, fan_out in dims:
        key, kw, kb = jax.random.split(key, 3)
        bound = 1.0 / (fan_in ** 0.5)
        w = jax.random.uniform(kw, (fan_in, fan_out), jnp.float32, -bound, bound)
        b = jax.random.uniform(kb, (1, fan_out), jnp.float32, -bound, bound)
        params.extend([w, b])
    return tuple(params)


def reference_forward(x, params):
    w1, b1, w2, b2, w3, b3, w4, b4 = params
    h = jax.nn.relu(x @ w1 + b1)
    h = jax.nn.relu(h @ w2 + b2)
    h = jax.nn.relu(h @ w3 + b3)
    return jax.nn.softmax(h @ w4 + b4, axis=1)


if __name__ == "__main__":
    key = jax.random.PRNGKey(0)
    batch, input_size = 256, 32
    hidden1, hidden2, hidden3, output_size = 64, 48, 32, 16

    kx, kp = jax.random.split(key)
    x = jax.random.normal(kx, (batch, input_size), jnp.float32)
    params = init_params(kp, input_size, hidden1, hidden2, hidden3, output_size)

    # One-time padding/casting (hoisted out of the per-call hot path).
    prepared = prepare_params(params, use_bf16=False)

    out = mlp_forward(x, prepared)
    out = jax.block_until_ready(out)

    ref = reference_forward(x, params)
    assert out.shape == (batch, output_size)
    assert jnp.allclose(out, ref, atol=1e-3, rtol=1e-3), "mismatch vs reference"
    assert jnp.allclose(jnp.sum(out, axis=1), 1.0, atol=1e-3), \
        "softmax rows must sum to 1"

    print("KERNEL_OK")
</pallas_src>

<mosaic_0001>
module attributes {stable_mosaic.version = 11 : i64} {
  func.func @_mlp_kernel(%arg0: i32, %arg1: memref<256x128xf32, #tpu.memory_space<vmem>>, %arg2: memref<128x128xf32, #tpu.memory_space<vmem>>, %arg3: memref<1x128xf32, #tpu.memory_space<vmem>>, %arg4: memref<128x128xf32, #tpu.memory_space<vmem>>, %arg5: memref<1x128xf32, #tpu.memory_space<vmem>>, %arg6: memref<128x128xf32, #tpu.memory_space<vmem>>, %arg7: memref<1x128xf32, #tpu.memory_space<vmem>>, %arg8: memref<128x128xf32, #tpu.memory_space<vmem>>, %arg9: memref<1x128xf32, #tpu.memory_space<vmem>>, %arg10: memref<256x128xf32, #tpu.memory_space<vmem>>) attributes {dimension_semantics = [#tpu.dimension_semantics<parallel>], iteration_bounds = array<i64: 1>, scalar_prefetch = 0 : i64, scratch_operands = 0 : i64, tpu.core_type = #tpu.core_type<tc>, window_params = [{transform_indices = @transform_0, window_bounds = array<i64: 256, 128>}, {pipeline_mode = #tpu.pipeline_mode<synchronous>, transform_indices = @transform_1, window_bounds = array<i64: 128, 128>}, {pipeline_mode = #tpu.pipeline_mode<synchronous>, transform_indices = @transform_2, window_bounds = array<i64: 1, 128>}, {pipeline_mode = #tpu.pipeline_mode<synchronous>, transform_indices = @transform_3, window_bounds = array<i64: 128, 128>}, {pipeline_mode = #tpu.pipeline_mode<synchronous>, transform_indices = @transform_4, window_bounds = array<i64: 1, 128>}, {pipeline_mode = #tpu.pipeline_mode<synchronous>, transform_indices = @transform_5, window_bounds = array<i64: 128, 128>}, {pipeline_mode = #tpu.pipeline_mode<synchronous>, transform_indices = @transform_6, window_bounds = array<i64: 1, 128>}, {pipeline_mode = #tpu.pipeline_mode<synchronous>, transform_indices = @transform_7, window_bounds = array<i64: 128, 128>}, {pipeline_mode = #tpu.pipeline_mode<synchronous>, transform_indices = @transform_8, window_bounds = array<i64: 1, 128>}, {transform_indices = @transform_9, window_bounds = array<i64: 256, 128>}]} {
    %c0 = arith.constant 0 : index
    %c0_0 = arith.constant 0 : index
    %0 = vector.load %arg1[%c0, %c0_0] : memref<256x128xf32, #tpu.memory_space<vmem>>, vector<256x128xf32>
    %c0_1 = arith.constant 0 : index
    %c0_2 = arith.constant 0 : index
    %1 = vector.load %arg2[%c0_1, %c0_2] : memref<128x128xf32, #tpu.memory_space<vmem>>, vector<128x128xf32>
    %cst = arith.constant dense<0.000000e+00> : vector<256x128xf32>
    %2 = tpu.matmul %0, %1, %cst {dimension_numbers = #tpu.dot_dimension_numbers<[1], [0], [0], [1], [0, 0, 1, 1], [], []>} : vector<256x128xf32>, vector<128x128xf32>, vector<256x128xf32> -> vector<256x128xf32>
    %c0_3 = arith.constant 0 : index
    %c0_4 = arith.constant 0 : index
    %3 = vector.load %arg3[%c0_3, %c0_4] : memref<1x128xf32, #tpu.memory_space<vmem>>, vector<1x128xf32>
    %4 = vector.broadcast %3 : vector<1x128xf32> to vector<256x128xf32>
    %5 = arith.addf %2, %4 : vector<256x128xf32>
    %cst_5 = arith.constant 0.000000e+00 : f32
    %6 = vector.broadcast %cst_5 : f32 to vector<256x128xf32>
    %7 = arith.maximumf %5, %6 : vector<256x128xf32>
    %c0_6 = arith.constant 0 : index
    %c0_7 = arith.constant 0 : index
    %8 = vector.load %arg4[%c0_6, %c0_7] : memref<128x128xf32, #tpu.memory_space<vmem>>, vector<128x128xf32>
    %cst_8 = arith.constant dense<0.000000e+00> : vector<256x128xf32>
    %9 = tpu.matmul %7, %8, %cst_8 {dimension_numbers = #tpu.dot_dimension_numbers<[1], [0], [0], [1], [0, 0, 1, 1], [], []>} : vector<256x128xf32>, vector<128x128xf32>, vector<256x128xf32> -> vector<256x128xf32>
    %c0_9 = arith.constant 0 : index
    %c0_10 = arith.constant 0 : index
    %10 = vector.load %arg5[%c0_9, %c0_10] : memref<1x128xf32, #tpu.memory_space<vmem>>, vector<1x128xf32>
    %11 = vector.broadcast %10 : vector<1x128xf32> to vector<256x128xf32>
    %12 = arith.addf %9, %11 : vector<256x128xf32>
    %cst_11 = arith.constant 0.000000e+00 : f32
    %13 = vector.broadcast %cst_11 : f32 to vector<256x128xf32>
    %14 = arith.maximumf %12, %13 : vector<256x128xf32>
    %c0_12 = arith.constant 0 : index
    %c0_13 = arith.constant 0 : index
    %15 = vector.load %arg6[%c0_12, %c0_13] : memref<128x128xf32, #tpu.memory_space<vmem>>, vector<128x128xf32>
    %cst_14 = arith.constant dense<0.000000e+00> : vector<256x128xf32>
    %16 = tpu.matmul %14, %15, %cst_14 {dimension_numbers = #tpu.dot_dimension_numbers<[1], [0], [0], [1], [0, 0, 1, 1], [], []>} : vector<256x128xf32>, vector<128x128xf32>, vector<256x128xf32> -> vector<256x128xf32>
    %c0_15 = arith.constant 0 : index
    %c0_16 = arith.constant 0 : index
    %17 = vector.load %arg7[%c0_15, %c0_16] : memref<1x128xf32, #tpu.memory_space<vmem>>, vector<1x128xf32>
    %18 = vector.broadcast %17 : vector<1x128xf32> to vector<256x128xf32>
    %19 = arith.addf %16, %18 : vector<256x128xf32>
    %cst_17 = arith.constant 0.000000e+00 : f32
    %20 = vector.broadcast %cst_17 : f32 to vector<256x128xf32>
    %21 = arith.maximumf %19, %20 : vector<256x128xf32>
    %c0_18 = arith.constant 0 : index
    %c0_19 = arith.constant 0 : index
    %22 = vector.load %arg8[%c0_18, %c0_19] : memref<128x128xf32, #tpu.memory_space<vmem>>, vector<128x128xf32>
    %cst_20 = arith.constant dense<0.000000e+00> : vector<256x128xf32>
    %23 = tpu.matmul %21, %22, %cst_20 {dimension_numbers = #tpu.dot_dimension_numbers<[1], [0], [0], [1], [0, 0, 1, 1], [], []>} : vector<256x128xf32>, vector<128x128xf32>, vector<256x128xf32> -> vector<256x128xf32>
    %c0_21 = arith.constant 0 : index
    %c0_22 = arith.constant 0 : index
    %24 = vector.load %arg9[%c0_21, %c0_22] : memref<1x128xf32, #tpu.memory_space<vmem>>, vector<1x128xf32>
    %25 = vector.broadcast %24 : vector<1x128xf32> to vector<256x128xf32>
    %26 = arith.addf %23, %25 : vector<256x128xf32>
    %cst_23 = arith.constant dense<0xFF800000> : vector<256xf32>
    %27 = vector.multi_reduction <maximumf>, %26, %cst_23 [1] : vector<256x128xf32> to vector<256xf32>
    %28 = vector.shape_cast %27 : vector<256xf32> to vector<256x1xf32>
    %29 = vector.broadcast %28 : vector<256x1xf32> to vector<256x128xf32>
    %30 = arith.subf %26, %29 : vector<256x128xf32>
    %31 = math.exp %30 : vector<256x128xf32>
    %cst_24 = arith.constant dense<0.000000e+00> : vector<256xf32>
    %32 = vector.multi_reduction <add>, %31, %cst_24 [1] : vector<256x128xf32> to vector<256xf32>
    %33 = vector.shape_cast %32 : vector<256xf32> to vector<256x1xf32>
    %34 = vector.broadcast %33 : vector<256x1xf32> to vector<256x128xf32>
    %35 = arith.divf %31, %34 : vector<256x128xf32>
    %c0_25 = arith.constant 0 : index
    %c0_26 = arith.constant 0 : index
    %36 = vector.load %arg10[%c0_25, %c0_26] : memref<256x128xf32, #tpu.memory_space<vmem>>, vector<256x128xf32>
    tpu.vector_store %arg10[%c0_25, %c0_26], %35 {strides = array<i32>} : memref<256x128xf32, #tpu.memory_space<vmem>>, vector<256x128xf32>,
    return
  }
  func.func @transform_0(%arg0: i32) -> (i32, i32) {
    %c0_i32 = arith.constant 0 : i32
    %c0_i32_0 = arith.constant 0 : i32
    return %arg0, %c0_i32 : i32, i32
  }
  func.func @transform_1(%arg0: i32) -> (i32, i32) {
    %c0_i32 = arith.constant 0 : i32
    %c0_i32_0 = arith.constant 0 : i32
    %c0_i32_1 = arith.constant 0 : i32
    return %c0_i32, %c0_i32_0 : i32, i32
  }
  func.func @transform_2(%arg0: i32) -> (i32, i32) {
    %c0_i32 = arith.constant 0 : i32
    %c0_i32_0 = arith.constant 0 : i32
    %c0_i32_1 = arith.constant 0 : i32
    return %c0_i32, %c0_i32_0 : i32, i32
  }
  func.func @transform_3(%arg0: i32) -> (i32, i32) {
    %c0_i32 = arith.constant 0 : i32
    %c0_i32_0 = arith.constant 0 : i32
    %c0_i32_1 = arith.constant 0 : i32
    return %c0_i32, %c0_i32_0 : i32, i32
  }
  func.func @transform_4(%arg0: i32) -> (i32, i32) {
    %c0_i32 = arith.constant 0 : i32
    %c0_i32_0 = arith.constant 0 : i32
    %c0_i32_1 = arith.constant 0 : i32
    return %c0_i32, %c0_i32_0 : i32, i32
  }
  func.func @transform_5(%arg0: i32) -> (i32, i32) {
    %c0_i32 = arith.constant 0 : i32
    %c0_i32_0 = arith.constant 0 : i32
    %c0_i32_1 = arith.constant 0 : i32
    return %c0_i32, %c0_i32_0 : i32, i32
  }
  func.func @transform_6(%arg0: i32) -> (i32, i32) {
    %c0_i32 = arith.constant 0 : i32
    %c0_i32_0 = arith.constant 0 : i32
    %c0_i32_1 = arith.constant 0 : i32
    return %c0_i32, %c0_i32_0 : i32, i32
  }
  func.func @transform_7(%arg0: i32) -> (i32, i32) {
    %c0_i32 = arith.constant 0 : i32
    %c0_i32_0 = arith.constant 0 : i32
    %c0_i32_1 = arith.constant 0 : i32
    return %c0_i32, %c0_i32_0 : i32, i32
  }
  func.func @transform_8(%arg0: i32) -> (i32, i32) {
    %c0_i32 = arith.constant 0 : i32
    %c0_i32_0 = arith.constant 0 : i32
    %c0_i32_1 = arith.constant 0 : i32
    return %c0_i32, %c0_i32_0 : i32, i32
  }
  func.func @transform_9(%arg0: i32) -> (i32, i32) {
    %c0_i32 = arith.constant 0 : i32
    %c0_i32_0 = arith.constant 0 : i32
    return %arg0, %c0_i32 : i32, i32
  }
}

</mosaic_0001>

<llo_original>
// kernel: _mlp_forward_jit.1
$region0: #{_mlp_forward_jit.1}
  #allocation0 [shape = 'u32[]', space=smem, size = 0x4, offset = 0x4, fixed_abs, tag = 'smem constant byte address 0x4 - core index']
  #allocation1 [shape = 'u32[144,128]{1,0:T(1,128)}', space=vmem, size = 0x12000, scoped, tag = 'internal scratch']
  %s0 = inlined_call_operand.vmem [shape: f32[256,128], index: 0, kind: input, shape index: {}]
  %s1 = inlined_call_operand.vmem [shape: f32[128,128], index: 1, kind: input, shape index: {}]
  %s2 = inlined_call_operand.vmem [shape: f32[1,128], index: 2, kind: input, shape index: {}]
  %s3 = inlined_call_operand.vmem [shape: f32[128,128], index: 3, kind: input, shape index: {}]
  %s4 = inlined_call_operand.vmem [shape: f32[1,128], index: 4, kind: input, shape index: {}]
  %s5 = inlined_call_operand.vmem [shape: f32[128,128], index: 5, kind: input, shape index: {}]
  %s6 = inlined_call_operand.vmem [shape: f32[1,128], index: 6, kind: input, shape index: {}]
  %s7 = inlined_call_operand.vmem [shape: f32[128,128], index: 7, kind: input, shape index: {}]
  %s8 = inlined_call_operand.vmem [shape: f32[1,128], index: 8, kind: input, shape index: {}]
  %s9 = inlined_call_operand.vmem [shape: f32[256,128], index: 9, kind: output, shape index: {}]
  %s10 = sld [smem:[#allocation0]]
  $region46: #{_mlp_forward_jit.1} parent=0
    _
  %s12 = ssub.s32 1, %s10
  %s13 = scalar_select 0, %s12, %s10
  // Predicated region
  $region2: #{_mlp_forward_jit.1} parent=0 // pred_check
    _
  $region3: #{_mlp_forward_jit.1} parent=0 // pred_check_branch
    %15 = sbr.rel (0) target = $region5
  $region4: #{_mlp_forward_jit.1} parent=0 // pred_region
    _
  $region5: #{_mlp_forward_jit.1} parent=0 // pred_fallthru
    _
  // Predicated region
  $region6: #{_mlp_forward_jit.1} parent=0 // pred_check
    _
  $region7: #{_mlp_forward_jit.1} parent=0 // pred_check_branch
    %17 = sbr.rel (0) target = $region9
  $region8: #{_mlp_forward_jit.1} parent=0 // pred_region
    _
  $region9: #{_mlp_forward_jit.1} parent=0 // pred_fallthru
    _
  // Predicated region
  $region10: #{_mlp_forward_jit.1} parent=0 // pred_check
    _
  $region11: #{_mlp_forward_jit.1} parent=0 // pred_check_branch
    %19 = sbr.rel (0) target = $region13
  $region12: #{_mlp_forward_jit.1} parent=0 // pred_region
    _
  $region13: #{_mlp_forward_jit.1} parent=0 // pred_fallthru
    _
  // Predicated region
  $region14: #{_mlp_forward_jit.1} parent=0 // pred_check
    _
  $region15: #{_mlp_forward_jit.1} parent=0 // pred_check_branch
    %21 = sbr.rel (0) target = $region17
  $region16: #{_mlp_forward_jit.1} parent=0 // pred_region
    _
  $region17: #{_mlp_forward_jit.1} parent=0 // pred_fallthru
    _
  // Predicated region
  $region18: #{_mlp_forward_jit.1} parent=0 // pred_check
    _
  $region19: #{_mlp_forward_jit.1} parent=0 // pred_check_branch
    %23 = sbr.rel (0) target = $region21
  $region20: #{_mlp_forward_jit.1} parent=0 // pred_region
    _
  $region21: #{_mlp_forward_jit.1} parent=0 // pred_fallthru
    _
  // Predicated region
  $region22: #{_mlp_forward_jit.1} parent=0 // pred_check
    _
  $region23: #{_mlp_forward_jit.1} parent=0 // pred_check_branch
    %25 = sbr.rel (0) target = $region25
  $region24: #{_mlp_forward_jit.1} parent=0 // pred_region
    _
  $region25: #{_mlp_forward_jit.1} parent=0 // pred_fallthru
    _
  // Predicated region
  $region26: #{_mlp_forward_jit.1} parent=0 // pred_check
    _
  $region27: #{_mlp_forward_jit.1} parent=0 // pred_check_branch
    %27 = sbr.rel (0) target = $region29
  $region28: #{_mlp_forward_jit.1} parent=0 // pred_region
    _
  $region29: #{_mlp_forward_jit.1} parent=0 // pred_fallthru
    _
  // Predicated region
  $region30: #{_mlp_forward_jit.1} parent=0 // pred_check
    _
  $region31: #{_mlp_forward_jit.1} parent=0 // pred_check_branch
    %29 = sbr.rel (0) target = $region33
  $region32: #{_mlp_forward_jit.1} parent=0 // pred_region
    _
  $region33: #{_mlp_forward_jit.1} parent=0 // pred_fallthru
    _
  // Predicated region
  $region34: #{_mlp_forward_jit.1} parent=0 // pred_check
    _
  $region35: #{_mlp_forward_jit.1} parent=0 // pred_check_branch
    %31 = sbr.rel (0) target = $region37
  $region36: #{_mlp_forward_jit.1} parent=0 // pred_region
    _
  $region37: #{_mlp_forward_jit.1} parent=0 // pred_fallthru
    _
  %v32 = vld [vmem:[%s0] sm:$0xff]
  %v33 = vld [vmem:[%s0 + $0x8] sm:$0xff]
  %v34 = vld [vmem:[%s0 + $0x10] sm:$0xff]
  %v35 = vld [vmem:[%s0 + $0x18] sm:$0xff]
  %v36 = vld [vmem:[%s0 + $0x20] sm:$0xff]
  %v37 = vld [vmem:[%s0 + $0x28] sm:$0xff]
  %v38 = vld [vmem:[%s0 + $0x30] sm:$0xff]
  %v39 = vld [vmem:[%s0 + $0x38] sm:$0xff]
  %v40 = vld [vmem:[%s0 + $0x40] sm:$0xff]
  %v41 = vld [vmem:[%s0 + $0x48] sm:$0xff]
  %v42 = vld [vmem:[%s0 + $0x50] sm:$0xff]
  %v43 = vld [vmem:[%s0 + $0x58] sm:$0xff]
  %v44 = vld [vmem:[%s0 + $0x60] sm:$0xff]
  %v45 = vld [vmem:[%s0 + $0x68] sm:$0xff]
  %v46 = vld [vmem:[%s0 + $0x70] sm:$0xff]
  %v47 = vld [vmem:[%s0 + $0x78] sm:$0xff]
  %v48 = vld [vmem:[%s0 + $0x80] sm:$0xff]
  %v49 = vld [vmem:[%s0 + $0x88] sm:$0xff]
  %v50 = vld [vmem:[%s0 + $0x90] sm:$0xff]
  %v51 = vld [vmem:[%s0 + $0x98] sm:$0xff]
  %v52 = vld [vmem:[%s0 + $0xa0] sm:$0xff]
  %v53 = vld [vmem:[%s0 + $0xa8] sm:$0xff]
  %v54 = vld [vmem:[%s0 + $0xb0] sm:$0xff]
  %v55 = vld [vmem:[%s0 + $0xb8] sm:$0xff]
  %v56 = vld [vmem:[%s0 + $0xc0] sm:$0xff]
  %v57 = vld [vmem:[%s0 + $0xc8] sm:$0xff]
  %v58 = vld [vmem:[%s0 + $0xd0] sm:$0xff]
  %v59 = vld [vmem:[%s0 + $0xd8] sm:$0xff]
  %v60 = vld [vmem:[%s0 + $0xe0] sm:$0xff]
  %v61 = vld [vmem:[%s0 + $0xe8] sm:$0xff]
  %v62 = vld [vmem:[%s0 + $0xf0] sm:$0xff]
  %v63 = vld [vmem:[%s0 + $0xf8] sm:$0xff]
  %v64 = vld [vmem:[%s1] sm:$0xff]
  %v65 = vld [vmem:[%s1 + $0x8] sm:$0xff]
  %v66 = vld [vmem:[%s1 + $0x10] sm:$0xff]
  %v67 = vld [vmem:[%s1 + $0x18] sm:$0xff]
  %v68 = vld [vmem:[%s1 + $0x20] sm:$0xff]
  %v69 = vld [vmem:[%s1 + $0x28] sm:$0xff]
  %v70 = vld [vmem:[%s1 + $0x30] sm:$0xff]
  %v71 = vld [vmem:[%s1 + $0x38] sm:$0xff]
  %v72 = vld [vmem:[%s1 + $0x40] sm:$0xff]
  %v73 = vld [vmem:[%s1 + $0x48] sm:$0xff]
  %v74 = vld [vmem:[%s1 + $0x50] sm:$0xff]
  %v75 = vld [vmem:[%s1 + $0x58] sm:$0xff]
  %v76 = vld [vmem:[%s1 + $0x60] sm:$0xff]
  %v77 = vld [vmem:[%s1 + $0x68] sm:$0xff]
  %v78 = vld [vmem:[%s1 + $0x70] sm:$0xff]
  %v79 = vld [vmem:[%s1 + $0x78] sm:$0xff]
  %v80 = vld [vmem:[%s2] sm:$0x1]
  %v82 = vlaneseq
  %v83 = vshrl.u32 %v82, 7
  %v84 = vsub.s32 0, %v83
  %v85 = vrot.slane %v80, %v84
  %87 = vmatprep.subr.mxu0 0.0
  %88 = vmatpush1.msra.mxu0 %v64
  %89 = vmatprep.subr.mxu0 0.0
  %90 = vmatpush1.msra.mxu0 %v65
  %91 = vmatprep.subr.mxu0 0.0
  %92 = vmatpush1.msra.mxu0 %v66
  %93 = vmatprep.subr.mxu0 0.0
  %94 = vmatpush1.msra.mxu0 %v67
  %95 = vmatprep.subr.mxu0 0.0
  %96 = vmatpush1.msra.mxu0 %v68
  %97 = vmatprep.subr.mxu0 0.0
  %98 = vmatpush1.msra.mxu0 %v69
  %99 = vmatprep.subr.mxu0 0.0
  %100 = vmatpush1.msra.mxu0 %v70
  %101 = vmatprep.subr.mxu0 0.0
  %102 = vmatpush1.msra.mxu0 %v71
  %103 = vmatprep.subr.mxu0 0.0
  %104 = vmatpush1.msra.mxu0 %v72
  %105 = vmatprep.subr.mxu0 0.0
  %106 = vmatpush1.msra.mxu0 %v73
  %107 = vmatprep.subr.mxu0 0.0
  %108 = vmatpush1.msra.mxu0 %v74
  %109 = vmatprep.subr.mxu0 0.0
  %110 = vmatpush1.msra.mxu0 %v75
  %111 = vmatprep.subr.mxu0 0.0
  %112 = vmatpush1.msra.mxu0 %v76
  %113 = vmatprep.subr.mxu0 0.0
  %114 = vmatpush1.msra.mxu0 %v77
  %115 = vmatprep.subr.mxu0 0.0
  %116 = vmatpush1.msra.mxu0 %v78
  %117 = vmatprep.subr.mxu0 0.0
  %118 = vmatpush1.msra.mxu0 %v79
  %119 = vmatprep.subr.mxu0 0.0
  %120 = vmatpush1.msra.mxu0 0.0
  %121 = vmatprep.subr.mxu0 0.0
  %122 = vmatpush1.msra.mxu0 0.0
  %123 = vmatprep.subr.mxu0 0.0
  %124 = vmatpush1.msra.mxu0 0.0
  %125 = vmatprep.subr.mxu0 0.0
  %126 = vmatpush1.msra.mxu0 0.0
  %127 = vmatprep.subr.mxu0 0.0
  %128 = vmatpush1.msra.mxu0 0.0
  %129 = vmatprep.subr.mxu0 0.0
  %130 = vmatpush1.msra.mxu0 0.0
  %131 = vmatprep.subr.mxu0 0.0
  %132 = vmatpush1.msra.mxu0 0.0
  %133 = vmatprep.subr.mxu0 0.0
  %134 = vmatpush1.msra.mxu0 0.0
  %135 = vmatprep.subr.mxu0 0.0
  %136 = vmatpush1.msra.mxu0 0.0
  %137 = vmatprep.subr.mxu0 0.0
  %138 = vmatpush1.msra.mxu0 0.0
  %139 = vmatprep.subr.mxu0 0.0
  %140 = vmatpush1.msra.mxu0 0.0
  %141 = vmatprep.subr.mxu0 0.0
  %142 = vmatpush1.msra.mxu0 0.0
  %143 = vmatprep.subr.mxu0 0.0
  %144 = vmatpush1.msra.mxu0 0.0
  %145 = vmatprep.subr.mxu0 0.0
  %146 = vmatpush1.msra.mxu0 0.0
  %147 = vmatprep.subr.mxu0 0.0
  %148 = vmatpush1.msra.mxu0 0.0
  %149 = vmatprep.subr.mxu0 0.0
  %150 = vmatpush1.msra.mxu0 0.0
  %151 = vmatprep.mubr.f32.mxu0 0.0
  %152 = vmatmul.mubr.f32.gmra.mrb[0].mxu0 %v32
  %v153 = vpop.f32.mrb[0].mxu0
  %v154 = vadd.f32 %v85, %v153
  %v155 = vpop.f32.mrb[0].mxu0
  %156 = vmatprep.mubr.f32.mxu0 0.0
  %157 = vmatmul.mubr.f32.gmra.mrb[0].mxu0 %v33
  %v158 = vpop.f32.mrb[0].mxu0
  %v159 = vadd.f32 %v85, %v158
  %v160 = vpop.f32.mrb[0].mxu0
  %161 = vmatprep.mubr.f32.mxu0 0.0
  %162 = vmatmul.mubr.f32.gmra.mrb[0].mxu0 %v34
  %v163 = vpop.f32.mrb[0].mxu0
  %v164 = vadd.f32 %v85, %v163
  %v165 = vpop.f32.mrb[0].mxu0
  %166 = vmatprep.mubr.f32.mxu0 0.0
  %167 = vmatmul.mubr.f32.gmra.mrb[0].mxu0 %v35
  %v168 = vpop.f32.mrb[0].mxu0
  %v169 = vadd.f32 %v85, %v168
  %v170 = vpop.f32.mrb[0].mxu0
  %171 = vmatprep.mubr.f32.mxu0 0.0
  %172 = vmatmul.mubr.f32.gmra.mrb[0].mxu0 %v36
  %v173 = vpop.f32.mrb[0].mxu0
  %v174 = vadd.f32 %v85, %v173
  %v175 = vpop.f32.mrb[0].mxu0
  %176 = vmatprep.mubr.f32.mxu0 0.0
  %177 = vmatmul.mubr.f32.gmra.mrb[0].mxu0 %v37
  %v178 = vpop.f32.mrb[0].mxu0
  %v179 = vadd.f32 %v85, %v178
  %v180 = vpop.f32.mrb[0].mxu0
  %181 = vmatprep.mubr.f32.mxu0 0.0
  %182 = vmatmul.mubr.f32.gmra.mrb[0].mxu0 %v38
  %v183 = vpop.f32.mrb[0].mxu0
  %v184 = vadd.f32 %v85, %v183
  %v185 = vpop.f32.mrb[0].mxu0
  %186 = vmatprep.mubr.f32.mxu0 0.0
  %187 = vmatmul.mubr.f32.gmra.mrb[0].mxu0 %v39
  %v188 = vpop.f32.mrb[0].mxu0
  %v189 = vadd.f32 %v85, %v188
  %v190 = vpop.f32.mrb[0].mxu0
  %191 = vmatprep.mubr.f32.mxu0 0.0
  %192 = vmatmul.mubr.f32.gmra.mrb[0].mxu0 %v40
  %v193 = vpop.f32.mrb[0].mxu0
  %v194 = vadd.f32 %v85, %v193
  %v195 = vpop.f32.mrb[0].mxu0
  %196 = vmatprep.mubr.f32.mxu0 0.0
  %197 = vmatmul.mubr.f32.gmra.mrb[0].mxu0 %v41
  %v198 = vpop.f32.mrb[0].mxu0
  %v199 = vadd.f32 %v85, %v198
  %v200 = vpop.f32.mrb[0].mxu0
  %201 = vmatprep.mubr.f32.mxu0 0.0
  %202 = vmatmul.mubr.f32.gmra.mrb[0].mxu0 %v42
  %v203 = vpop.f32.mrb[0].mxu0
  %v204 = vadd.f32 %v85, %v203
  %v205 = vpop.f32.mrb[0].mxu0
  %206 = vmatprep.mubr.f32.mxu0 0.0
  %207 = vmatmul.mubr.f32.gmra.mrb[0].mxu0 %v43
  %v208 = vpop.f32.mrb[0].mxu0
  %v209 = vadd.f32 %v85, %v208
  %v210 = vpop.f32.mrb[0].mxu0
  %211 = vmatprep.mubr.f32.mxu0 0.0
  %212 = vmatmul.mubr.f32.gmra.mrb[0].mxu0 %v44
  %v213 = vpop.f32.mrb[0].mxu0
  %v214 = vadd.f32 %v85, %v213
  %v215 = vpop.f32.mrb[0].mxu0
  %216 = vmatprep.mubr.f32.mxu0 0.0
  %217 = vmatmul.mubr.f32.gmra.mrb[0].mxu0 %v45
  %v218 = vpop.f32.mrb[0].mxu0
  %v219 = vadd.f32 %v85, %v218
  %v220 = vpop.f32.mrb[0].mxu0
  %221 = vmatprep.mubr.f32.mxu0 0.0
  %222 = vmatmul.mubr.f32.gmra.mrb[0].mxu0 %v46
  %v223 = vpop.f32.mrb[0].mxu0
  %v224 = vadd.f32 %v85, %v223
  %v225 = vpop.f32.mrb[0].mxu0
  %226 = vmatprep.mubr.f32.mxu0 0.0
  %227 = vmatmul.mubr.f32.gmra.mrb[0].mxu0 %v47
  %v228 = vpop.f32.mrb[0].mxu0
  %v229 = vadd.f32 %v85, %v228
  %v230 = vpop.f32.mrb[0].mxu0
  %231 = vmatprep.mubr.f32.mxu0 0.0
  %232 = vmatmul.mubr.f32.gmra.mrb[0].mxu0 %v48
  %v233 = vpop.f32.mrb[0].mxu0
  %v234 = vadd.f32 %v85, %v233
  %v235 = vpop.f32.mrb[0].mxu0
  %236 = vmatprep.mubr.f32.mxu0 0.0
  %237 = vmatmul.mubr.f32.gmra.mrb[0].mxu0 %v49
  %v238 = vpop.f32.mrb[0].mxu0
  %v239 = vadd.f32 %v85, %v238
  %v240 = vpop.f32.mrb[0].mxu0
  %241 = vmatprep.mubr.f32.mxu0 0.0
  %242 = vmatmul.mubr.f32.gmra.mrb[0].mxu0 %v50
  %v243 = vpop.f32.mrb[0].mxu0
  %v244 = vadd.f32 %v85, %v243
  %v245 = vpop.f32.mrb[0].mxu0
  %246 = vmatprep.mubr.f32.mxu0 0.0
  %247 = vmatmul.mubr.f32.gmra.mrb[0].mxu0 %v51
  %v248 = vpop.f32.mrb[0].mxu0
  %v249 = vadd.f32 %v85, %v248
  %v250 = vpop.f32.mrb[0].mxu0
  %251 = vmatprep.mubr.f32.mxu0 0.0
  %252 = vmatmul.mubr.f32.gmra.mrb[0].mxu0 %v52
  %v253 = vpop.f32.mrb[0].mxu0
  %v254 = vadd.f32 %v85, %v253
  %v255 = vpop.f32.mrb[0].mxu0
  %256 = vmatprep.mubr.f32.mxu0 0.0
  %257 = vmatmul.mubr.f32.gmra.mrb[0].mxu0 %v53
  %v258 = vpop.f32.mrb[0].mxu0
  %v259 = vadd.f32 %v85, %v258
  %v260 = vpop.f32.mrb[0].mxu0
  %261 = vmatprep.mubr.f32.mxu0 0.0
  %262 = vmatmul.mubr.f32.gmra.mrb[0].mxu0 %v54
  %v263 = vpop.f32.mrb[0].mxu0
  %v264 = vadd.f32 %v85, %v263
  %v265 = vpop.f32.mrb[0].mxu0
  %266 = vmatprep.mubr.f32.mxu0 0.0
  %267 = vmatmul.mubr.f32.gmra.mrb[0].mxu0 %v55
  %v268 = vpop.f32.mrb[0].mxu0
  %v269 = vadd.f32 %v85, %v268
  %v270 = vpop.f32.mrb[0].mxu0
  %271 = vmatprep.mubr.f32.mxu0 0.0
  %272 = vmatmul.mubr.f32.gmra.mrb[0].mxu0 %v56
  %v273 = vpop.f32.mrb[0].mxu0
  %v274 = vadd.f32 %v85, %v273
  %v275 = vpop.f32.mrb[0].mxu0
  %276 = vmatprep.mubr.f32.mxu0 0.0
  %277 = vmatmul.mubr.f32.gmra.mrb[0].mxu0 %v57
  %v278 = vpop.f32.mrb[0].mxu0
  %v279 = vadd.f32 %v85, %v278
  %v280 = vpop.f32.mrb[0].mxu0
  %281 = vmatprep.mubr.f32.mxu0 0.0
  %282 = vmatmul.mubr.f32.gmra.mrb[0].mxu0 %v58
  %v283 = vpop.f32.mrb[0].mxu0
  %v284 = vadd.f32 %v85, %v283
  %v285 = vpop.f32.mrb[0].mxu0
  %286 = vmatprep.mubr.f32.mxu0 0.0
  %287 = vmatmul.mubr.f32.gmra.mrb[0].mxu0 %v59
  %v288 = vpop.f32.mrb[0].mxu0
  %v289 = vadd.f32 %v85, %v288
  %v290 = vpop.f32.mrb[0].mxu0
  %291 = vmatprep.mubr.f32.mxu0 0.0
  %292 = vmatmul.mubr.f32.gmra.mrb[0].mxu0 %v60
  %v293 = vpop.f32.mrb[0].mxu0
  %v294 = vadd.f32 %v85, %v293
  %v295 = vpop.f32.mrb[0].mxu0
  %296 = vmatprep.mubr.f32.mxu0 0.0
  %297 = vmatmul.mubr.f32.gmra.mrb[0].mxu0 %v61
  %v298 = vpop.f32.mrb[0].mxu0
  %v299 = vadd.f32 %v85, %v298
  %v300 = vpop.f32.mrb[0].mxu0
  %301 = vmatprep.mubr.f32.mxu0 0.0
  %302 = vmatmul.mubr.f32.gmra.mrb[0].mxu0 %v62
  %v303 = vpop.f32.mrb[0].mxu0
  %v304 = vadd.f32 %v85, %v303
  %v305 = vpop.f32.mrb[0].mxu0
  %306 = vmatprep.mubr.f32.mxu0 0.0
  %307 = vmatmul.mubr.f32.gmra.mrb[0].mxu0 %v63
  %v308 = vpop.f32.mrb[0].mxu0
  %v309 = vadd.f32 %v85, %v308
  %v310 = vpop.f32.mrb[0].mxu0
  %311 = vdwg.mxu0
  %v312 = vmax.f32 %v154, 0.0
  %v313 = vmax.f32 %v159, 0.0
  %v314 = vmax.f32 %v164, 0.0
  %v315 = vmax.f32 %v169, 0.0
  %v316 = vmax.f32 %v174, 0.0
  %v317 = vmax.f32 %v179, 0.0
  %v318 = vmax.f32 %v184, 0.0
  %v319 = vmax.f32 %v189, 0.0
  %v320 = vmax.f32 %v194, 0.0
  %v321 = vmax.f32 %v199, 0.0
  %v322 = vmax.f32 %v204, 0.0
  %v323 = vmax.f32 %v209, 0.0
  %v324 = vmax.f32 %v214, 0.0
  %v325 = vmax.f32 %v219, 0.0
  %v326 = vmax.f32 %v224, 0.0
  %v327 = vmax.f32 %v229, 0.0
  %v328 = vmax.f32 %v234, 0.0
  %v329 = vmax.f32 %v239, 0.0
  %v330 = vmax.f32 %v244, 0.0
  %v331 = vmax.f32 %v249, 0.0
  %v332 = vmax.f32 %v254, 0.0
  %v333 = vmax.f32 %v259, 0.0
  %v334 = vmax.f32 %v264, 0.0
  %v335 = vmax.f32 %v269, 0.0
  %v336 = vmax.f32 %v274, 0.0
  %v337 = vmax.f32 %v279, 0.0
  %v338 = vmax.f32 %v284, 0.0
  %v339 = vmax.f32 %v289, 0.0
  %v340 = vmax.f32 %v294, 0.0
  %v341 = vmax.f32 %v299, 0.0
  %v342 = vmax.f32 %v304, 0.0
  %v343 = vmax.f32 %v309, 0.0
  %v344 = vld [vmem:[%s3] sm:$0xff]
  %v345 = vld [vmem:[%s3 + $0x8] sm:$0xff]
  %v346 = vld [vmem:[%s3 + $0x10] sm:$0xff]
  %v347 = vld [vmem:[%s3 + $0x18] sm:$0xff]
  %v348 = vld [vmem:[%s3 + $0x20] sm:$0xff]
  %v349 = vld [vmem:[%s3 + $0x28] sm:$0xff]
  %v350 = vld [vmem:[%s3 + $0x30] sm:$0xff]
  %v351 = vld [vmem:[%s3 + $0x38] sm:$0xff]
  %v352 = vld [vmem:[%s3 + $0x40] sm:$0xff]
  %v353 = vld [vmem:[%s3 + $0x48] sm:$0xff]
  %v354 = vld [vmem:[%s3 + $0x50] sm:$0xff]
  %v355 = vld [vmem:[%s3 + $0x58] sm:$0xff]
  %v356 = vld [vmem:[%s3 + $0x60] sm:$0xff]
  %v357 = vld [vmem:[%s3 + $0x68] sm:$0xff]
  %v358 = vld [vmem:[%s3 + $0x70] sm:$0xff]
  %v359 = vld [vmem:[%s3 + $0x78] sm:$0xff]
  %v360 = vld [vmem:[%s4] sm:$0x1]
  %v362 = vlaneseq
  %v363 = vshrl.u32 %v362, 7
  %v364 = vsub.s32 0, %v363
  %v365 = vrot.slane %v360, %v364
  %367 = vmatprep.subr.mxu0 0.0
  %368 = vmatpush1.msra.mxu0 %v344
  %369 = vmatprep.subr.mxu0 0.0
  %370 = vmatpush1.msra.mxu0 %v345
  %371 = vmatprep.subr.mxu0 0.0
  %372 = vmatpush1.msra.mxu0 %v346
  %373 = vmatprep.subr.mxu0 0.0
  %374 = vmatpush1.msra.mxu0 %v347
  %375 = vmatprep.subr.mxu0 0.0
  %376 = vmatpush1.msra.mxu0 %v348
  %377 = vmatprep.subr.mxu0 0.0
  %378 = vmatpush1.msra.mxu0 %v349
  %379 = vmatprep.subr.mxu0 0.0
  %380 = vmatpush1.msra.mxu0 %v350
  %381 = vmatprep.subr.mxu0 0.0
  %382 = vmatpush1.msra.mxu0 %v351
  %383 = vmatprep.subr.mxu0 0.0
  %384 = vmatpush1.msra.mxu0 %v352
  %385 = vmatprep.subr.mxu0 0.0
  %386 = vmatpush1.msra.mxu0 %v353
  %387 = vmatprep.subr.mxu0 0.0
  %388 = vmatpush1.msra.mxu0 %v354
  %389 = vmatprep.subr.mxu0 0.0
  %390 = vmatpush1.msra.mxu0 %v355
  %391 = vmatprep.subr.mxu0 0.0
  %392 = vmatpush1.msra.mxu0 %v356
  %393 = vmatprep.subr.mxu0 0.0
  %394 = vmatpush1.msra.mxu0 %v357
  %395 = vmatprep.subr.mxu0 0.0
  %396 = vmatpush1.msra.mxu0 %v358
  %397 = vmatprep.subr.mxu0 0.0
  %398 = vmatpush1.msra.mxu0 %v359
  %399 = vmatprep.subr.mxu0 0.0
  %400 = vmatpush1.msra.mxu0 0.0
  %401 = vmatprep.subr.mxu0 0.0
  %402 = vmatpush1.msra.mxu0 0.0
  %403 = vmatprep.subr.mxu0 0.0
  %404 = vmatpush1.msra.mxu0 0.0
  %405 = vmatprep.subr.mxu0 0.0
  %406 = vmatpush1.msra.mxu0 0.0
  %407 = vmatprep.subr.mxu0 0.0
  %408 = vmatpush1.msra.mxu0 0.0
  %409 = vmatprep.subr.mxu0 0.0
  %410 = vmatpush1.msra.mxu0 0.0
  %411 = vmatprep.subr.mxu0 0.0
  %412 = vmatpush1.msra.mxu0 0.0
  %413 = vmatprep.subr.mxu0 0.0
  %414 = vmatpush1.msra.mxu0 0.0
  %415 = vmatprep.subr.mxu0 0.0
  %416 = vmatpush1.msra.mxu0 0.0
  %417 = vmatprep.subr.mxu0 0.0
  %418 = vmatpush1.msra.mxu0 0.0
  %419 = vmatprep.subr.mxu0 0.0
  %420 = vmatpush1.msra.mxu0 0.0
  %421 = vmatprep.subr.mxu0 0.0
  %422 = vmatpush1.msra.mxu0 0.0
  %423 = vmatprep.subr.mxu0 0.0
  %424 = vmatpush1.msra.mxu0 0.0
  %425 = vmatprep.subr.mxu0 0.0
  %426 = vmatpush1.msra.mxu0 0.0
  %427 = vmatprep.subr.mxu0 0.0
  %428 = vmatpush1.msra.mxu0 0.0
  %429 = vmatprep.subr.mxu0 0.0
  %430 = vmatpush1.msra.mxu0 0.0
  %431 = vmatprep.mubr.f32.mxu0 0.0
  %432 = vmatmul.mubr.f32.gmra.mrb[0].mxu0 %v312
  %v433 = vpop.f32.mrb[0].mxu0
  %v434 = vadd.f32 %v365, %v433
  %v435 = vpop.f32.mrb[0].mxu0
  %436 = vmatprep.mubr.f32.mxu0 0.0
  %437 = vmatmul.mubr.f32.gmra.mrb[0].mxu0 %v313
  %v438 = vpop.f32.mrb[0].mxu0
  %v439 = vadd.f32 %v365, %v438
  %v440 = vpop.f32.mrb[0].mxu0
  %441 = vmatprep.mubr.f32.mxu0 0.0
  %442 = vmatmul.mubr.f32.gmra.mrb[0].mxu0 %v314
  %v443 = vpop.f32.mrb[0].mxu0
  %v444 = vadd.f32 %v365, %v443
  %v445 = vpop.f32.mrb[0].mxu0
  %446 = vmatprep.mubr.f32.mxu0 0.0
  %447 = vmatmul.mubr.f32.gmra.mrb[0].mxu0 %v315
  %v448 = vpop.f32.mrb[0].mxu0
  %v449 = vadd.f32 %v365, %v448
  %v450 = vpop.f32.mrb[0].mxu0
  %451 = vmatprep.mubr.f32.mxu0 0.0
  %452 = vmatmul.mubr.f32.gmra.mrb[0].mxu0 %v316
  %v453 = vpop.f32.mrb[0].mxu0
  %v454 = vadd.f32 %v365, %v453
  %v455 = vpop.f32.mrb[0].mxu0
  %456 = vmatprep.mubr.f32.mxu0 0.0
  %457 = vmatmul.mubr.f32.gmra.mrb[0].mxu0 %v317
  %v458 = vpop.f32.mrb[0].mxu0
  %v459 = vadd.f32 %v365, %v458
  %v460 = vpop.f32.mrb[0].mxu0
  %461 = vmatprep.mubr.f32.mxu0 0.0
  %462 = vmatmul.mubr.f32.gmra.mrb[0].mxu0 %v318
  %v463 = vpop.f32.mrb[0].mxu0
  %v464 = vadd.f32 %v365, %v463
  %v465 = vpop.f32.mrb[0].mxu0
  %466 = vmatprep.mubr.f32.mxu0 0.0
  %467 = vmatmul.mubr.f32.gmra.mrb[0].mxu0 %v319
  %v468 = vpop.f32.mrb[0].mxu0
  %v469 = vadd.f32 %v365, %v468
  %v470 = vpop.f32.mrb[0].mxu0
  %471 = vmatprep.mubr.f32.mxu0 0.0
  %472 = vmatmul.mubr.f32.gmra.mrb[0].mxu0 %v320
  %v473 = vpop.f32.mrb[0].mxu0
  %v474 = vadd.f32 %v365, %v473
  %v475 = vpop.f32.mrb[0].mxu0
  %476 = vmatprep.mubr.f32.mxu0 0.0
  %477 = vmatmul.mubr.f32.gmra.mrb[0].mxu0 %v321
  %v478 = vpop.f32.mrb[0].mxu0
  %v479 = vadd.f32 %v365, %v478
  %v480 = vpop.f32.mrb[0].mxu0
  %481 = vmatprep.mubr.f32.mxu0 0.0
  %482 = vmatmul.mubr.f32.gmra.mrb[0].mxu0 %v322
  %v483 = vpop.f32.mrb[0].mxu0
  %v484 = vadd.f32 %v365, %v483
  %v485 = vpop.f32.mrb[0].mxu0
  %486 = vmatprep.mubr.f32.mxu0 0.0
  %487 = vmatmul.mubr.f32.gmra.mrb[0].mxu0 %v323
  %v488 = vpop.f32.mrb[0].mxu0
  %v489 = vadd.f32 %v365, %v488
  %v490 = vpop.f32.mrb[0].mxu0
  %491 = vmatprep.mubr.f32.mxu0 0.0
  %492 = vmatmul.mubr.f32.gmra.mrb[0].mxu0 %v324
  %v493 = vpop.f32.mrb[0].mxu0
  %v494 = vadd.f32 %v365, %v493
  %v495 = vpop.f32.mrb[0].mxu0
  %496 = vmatprep.mubr.f32.mxu0 0.0
  %497 = vmatmul.mubr.f32.gmra.mrb[0].mxu0 %v325
  %v498 = vpop.f32.mrb[0].mxu0
  %v499 = vadd.f32 %v365, %v498
  %v500 = vpop.f32.mrb[0].mxu0
  %501 = vmatprep.mubr.f32.mxu0 0.0
  %502 = vmatmul.mubr.f32.gmra.mrb[0].mxu0 %v326
  %v503 = vpop.f32.mrb[0].mxu0
  %v504 = vadd.f32 %v365, %v503
  %v505 = vpop.f32.mrb[0].mxu0
  %506 = vmatprep.mubr.f32.mxu0 0.0
  %507 = vmatmul.mubr.f32.gmra.mrb[0].mxu0 %v327
  %v508 = vpop.f32.mrb[0].mxu0
  %v509 = vadd.f32 %v365, %v508
  %v510 = vpop.f32.mrb[0].mxu0
  %511 = vmatprep.mubr.f32.mxu0 0.0
  %512 = vmatmul.mubr.f32.gmra.mrb[0].mxu0 %v328
  %v513 = vpop.f32.mrb[0].mxu0
  %v514 = vadd.f32 %v365, %v513
  %v515 = vpop.f32.mrb[0].mxu0
  %516 = vmatprep.mubr.f32.mxu0 0.0
  %517 = vmatmul.mubr.f32.gmra.mrb[0].mxu0 %v329
  %v518 = vpop.f32.mrb[0].mxu0
  %v519 = vadd.f32 %v365, %v518
  %v520 = vpop.f32.mrb[0].mxu0
  %521 = vmatprep.mubr.f32.mxu0 0.0
  %522 = vmatmul.mubr.f32.gmra.mrb[0].mxu0 %v330
  %v523 = vpop.f32.mrb[0].mxu0
  %v524 = vadd.f32 %v365, %v523
  %v525 = vpop.f32.mrb[0].mxu0
  %526 = vmatprep.mubr.f32.mxu0 0.0
  %527 = vmatmul.mubr.f32.gmra.mrb[0].mxu0 %v331
  %v528 = vpop.f32.mrb[0].mxu0
  %v529 = vadd.f32 %v365, %v528
  %v530 = vpop.f32.mrb[0].mxu0
  %531 = vmatprep.mubr.f32.mxu0 0.0
  %532 = vmatmul.mubr.f32.gmra.mrb[0].mxu0 %v332
  %v533 = vpop.f32.mrb[0].mxu0
  %v534 = vadd.f32 %v365, %v533
  %v535 = vpop.f32.mrb[0].mxu0
  %536 = vmatprep.mubr.f32.mxu0 0.0
  %537 = vmatmul.mubr.f32.gmra.mrb[0].mxu0 %v333
  %v538 = vpop.f32.mrb[0].mxu0
  %v539 = vadd.f32 %v365, %v538
  %v540 = vpop.f32.mrb[0].mxu0
  %541 = vmatprep.mubr.f32.mxu0 0.0
  %542 = vmatmul.mubr.f32.gmra.mrb[0].mxu0 %v334
  %v543 = vpop.f32.mrb[0].mxu0
  %v544 = vadd.f32 %v365, %v543
  %v545 = vpop.f32.mrb[0].mxu0
  %546 = vmatprep.mubr.f32.mxu0 0.0
  %547 = vmatmul.mubr.f32.gmra.mrb[0].mxu0 %v335
  %v548 = vpop.f32.mrb[0].mxu0
  %v549 = vadd.f32 %v365, %v548
  %v550 = vpop.f32.mrb[0].mxu0
  %551 = vmatprep.mubr.f32.mxu0 0.0
  %552 = vmatmul.mubr.f32.gmra.mrb[0].mxu0 %v336
  %v553 = vpop.f32.mrb[0].mxu0
  %v554 = vadd.f32 %v365, %v553
  %v555 = vpop.f32.mrb[0].mxu0
  %556 = vmatprep.mubr.f32.mxu0 0.0
  %557 = vmatmul.mubr.f32.gmra.mrb[0].mxu0 %v337
  %v558 = vpop.f32.mrb[0].mxu0
  %v559 = vadd.f32 %v365, %v558
  %v560 = vpop.f32.mrb[0].mxu0
  %561 = vmatprep.mubr.f32.mxu0 0.0
  %562 = vmatmul.mubr.f32.gmra.mrb[0].mxu0 %v338
  %v563 = vpop.f32.mrb[0].mxu0
  %v564 = vadd.f32 %v365, %v563
  %v565 = vpop.f32.mrb[0].mxu0
  %566 = vmatprep.mubr.f32.mxu0 0.0
  %567 = vmatmul.mubr.f32.gmra.mrb[0].mxu0 %v339
  %v568 = vpop.f32.mrb[0].mxu0
  %v569 = vadd.f32 %v365, %v568
  %v570 = vpop.f32.mrb[0].mxu0
  %571 = vmatprep.mubr.f32.mxu0 0.0
  %572 = vmatmul.mubr.f32.gmra.mrb[0].mxu0 %v340
  %v573 = vpop.f32.mrb[0].mxu0
  %v574 = vadd.f32 %v365, %v573
  %v575 = vpop.f32.mrb[0].mxu0
  %576 = vmatprep.mubr.f32.mxu0 0.0
  %577 = vmatmul.mubr.f32.gmra.mrb[0].mxu0 %v341
  %v578 = vpop.f32.mrb[0].mxu0
  %v579 = vadd.f32 %v365, %v578
  %v580 = vpop.f32.mrb[0].mxu0
  %581 = vmatprep.mubr.f32.mxu0 0.0
  %582 = vmatmul.mubr.f32.gmra.mrb[0].mxu0 %v342
  %v583 = vpop.f32.mrb[0].mxu0
  %v584 = vadd.f32 %v365, %v583
  %v585 = vpop.f32.mrb[0].mxu0
  %586 = vmatprep.mubr.f32.mxu0 0.0
  %587 = vmatmul.mubr.f32.gmra.mrb[0].mxu0 %v343
  %v588 = vpop.f32.mrb[0].mxu0
  %v589 = vadd.f32 %v365, %v588
  %v590 = vpop.f32.mrb[0].mxu0
  %591 = vdwg.mxu0
  %v592 = vmax.f32 %v434, 0.0
  %v593 = vmax.f32 %v439, 0.0
  %v594 = vmax.f32 %v444, 0.0
  %v595 = vmax.f32 %v449, 0.0
  %v596 = vmax.f32 %v454, 0.0
  %v597 = vmax.f32 %v459, 0.0
  %v598 = vmax.f32 %v464, 0.0
  %v599 = vmax.f32 %v469, 0.0
  %v600 = vmax.f32 %v474, 0.0
  %v601 = vmax.f32 %v479, 0.0
  %v602 = vmax.f32 %v484, 0.0
  %v603 = vmax.f32 %v489, 0.0
  %v604 = vmax.f32 %v494, 0.0
  %v605 = vmax.f32 %v499, 0.0
  %v606 = vmax.f32 %v504, 0.0
  %v607 = vmax.f32 %v509, 0.0
  %v608 = vmax.f32 %v514, 0.0
  %v609 = vmax.f32 %v519, 0.0
  %v610 = vmax.f32 %v524, 0.0
  %v611 = vmax.f32 %v529, 0.0
  %v612 = vmax.f32 %v534, 0.0
  %v613 = vmax.f32 %v539, 0.0
  %v614 = vmax.f32 %v544, 0.0
  %v615 = vmax.f32 %v549, 0.0
  %v616 = vmax.f32 %v554, 0.0
  %v617 = vmax.f32 %v559, 0.0
  %v618 = vmax.f32 %v564, 0.0
  %v619 = vmax.f32 %v569, 0.0
  %v620 = vmax.f32 %v574, 0.0
  %v621 = vmax.f32 %v579, 0.0
  %v622 = vmax.f32 %v584, 0.0
  %v623 = vmax.f32 %v589, 0.0
  %v624 = vld [vmem:[%s5] sm:$0xff]
  %v625 = vld [vmem:[%s5 + $0x8] sm:$0xff]
  %v626 = vld [vmem:[%s5 + $0x10] sm:$0xff]
  %v627 = vld [vmem:[%s5 + $0x18] sm:$0xff]
  %v628 = vld [vmem:[%s5 + $0x20] sm:$0xff]
  %v629 = vld [vmem:[%s5 + $0x28] sm:$0xff]
  %v630 = vld [vmem:[%s5 + $0x30] sm:$0xff]
  %v631 = vld [vmem:[%s5 + $0x38] sm:$0xff]
  %v632 = vld [vmem:[%s5 + $0x40] sm:$0xff]
  %v633 = vld [vmem:[%s5 + $0x48] sm:$0xff]
  %v634 = vld [vmem:[%s5 + $0x50] sm:$0xff]
  %v635 = vld [vmem:[%s5 + $0x58] sm:$0xff]
  %v636 = vld [vmem:[%s5 + $0x60] sm:$0xff]
  %v637 = vld [vmem:[%s5 + $0x68] sm:$0xff]
  %v638 = vld [vmem:[%s5 + $0x70] sm:$0xff]
  %v639 = vld [vmem:[%s5 + $0x78] sm:$0xff]
  %v640 = vld [vmem:[%s6] sm:$0x1]
  %v642 = vlaneseq
  %v643 = vshrl.u32 %v642, 7
  %v644 = vsub.s32 0, %v643
  %v645 = vrot.slane %v640, %v644
  %647 = vmatprep.subr.mxu0 0.0
  %648 = vmatpush1.msra.mxu0 %v624
  %649 = vmatprep.subr.mxu0 0.0
  %650 = vmatpush1.msra.mxu0 %v625
  %651 = vmatprep.subr.mxu0 0.0
  %652 = vmatpush1.msra.mxu0 %v626
  %653 = vmatprep.subr.mxu0 0.0
  %654 = vmatpush1.msra.mxu0 %v627
  %655 = vmatprep.subr.mxu0 0.0
  %656 = vmatpush1.msra.mxu0 %v628
  %657 = vmatprep.subr.mxu0 0.0
  %658 = vmatpush1.msra.mxu0 %v629
  %659 = vmatprep.subr.mxu0 0.0
  %660 = vmatpush1.msra.mxu0 %v630
  %661 = vmatprep.subr.mxu0 0.0
  %662 = vmatpush1.msra.mxu0 %v631
  %663 = vmatprep.subr.mxu0 0.0
  %664 = vmatpush1.msra.mxu0 %v632
  %665 = vmatprep.subr.mxu0 0.0
  %666 = vmatpush1.msra.mxu0 %v633
  %667 = vmatprep.subr.mxu0 0.0
  %668 = vmatpush1.msra.mxu0 %v634
  %669 = vmatprep.subr.mxu0 0.0
  %670 = vmatpush1.msra.mxu0 %v635
  %671 = vmatprep.subr.mxu0 0.0
  %672 = vmatpush1.msra.mxu0 %v636
  %673 = vmatprep.subr.mxu0 0.0
  %674 = vmatpush1.msra.mxu0 %v637
  %675 = vmatprep.subr.mxu0 0.0
  %676 = vmatpush1.msra.mxu0 %v638
  %677 = vmatprep.subr.mxu0 0.0
  %678 = vmatpush1.msra.mxu0 %v639
  %679 = vmatprep.subr.mxu0 0.0
  %680 = vmatpush1.msra.mxu0 0.0
  %681 = vmatprep.subr.mxu0 0.0
  %682 = vmatpush1.msra.mxu0 0.0
  %683 = vmatprep.subr.mxu0 0.0
  %684 = vmatpush1.msra.mxu0 0.0
  %685 = vmatprep.subr.mxu0 0.0
  %686 = vmatpush1.msra.mxu0 0.0
  %687 = vmatprep.subr.mxu0 0.0
  %688 = vmatpush1.msra.mxu0 0.0
  %689 = vmatprep.subr.mxu0 0.0
  %690 = vmatpush1.msra.mxu0 0.0
  %691 = vmatprep.subr.mxu0 0.0
  %692 = vmatpush1.msra.mxu0 0.0
  %693 = vmatprep.subr.mxu0 0.0
  %694 = vmatpush1.msra.mxu0 0.0
  %695 = vmatprep.subr.mxu0 0.0
  %696 = vmatpush1.msra.mxu0 0.0
  %697 = vmatprep.subr.mxu0 0.0
  %698 = vmatpush1.msra.mxu0 0.0
  %699 = vmatprep.subr.mxu0 0.0
  %700 = vmatpush1.msra.mxu0 0.0
  %701 = vmatprep.subr.mxu0 0.0
  %702 = vmatpush1.msra.mxu0 0.0
  %703 = vmatprep.subr.mxu0 0.0
  %704 = vmatpush1.msra.mxu0 0.0
  %705 = vmatprep.subr.mxu0 0.0
  %706 = vmatpush1.msra.mxu0 0.0
  %707 = vmatprep.subr.mxu0 0.0
  %708 = vmatpush1.msra.mxu0 0.0
  %709 = vmatprep.subr.mxu0 0.0
  %710 = vmatpush1.msra.mxu0 0.0
  %711 = vmatprep.mubr.f32.mxu0 0.0
  %712 = vmatmul.mubr.f32.gmra.mrb[0].mxu0 %v592
  %v713 = vpop.f32.mrb[0].mxu0
  %v714 = vadd.f32 %v645, %v713
  %v715 = vpop.f32.mrb[0].mxu0
  %716 = vmatprep.mubr.f32.mxu0 0.0
  %717 = vmatmul.mubr.f32.gmra.mrb[0].mxu0 %v593
  %v718 = vpop.f32.mrb[0].mxu0
  %v719 = vadd.f32 %v645, %v718
  %v720 = vpop.f32.mrb[0].mxu0
  %721 = vmatprep.mubr.f32.mxu0 0.0
  %722 = vmatmul.mubr.f32.gmra.mrb[0].mxu0 %v594
  %v723 = vpop.f32.mrb[0].mxu0
  %v724 = vadd.f32 %v645, %v723
  %v725 = vpop.f32.mrb[0].mxu0
  %726 = vmatprep.mubr.f32.mxu0 0.0
  %727 = vmatmul.mubr.f32.gmra.mrb[0].mxu0 %v595
  %v728 = vpop.f32.mrb[0].mxu0
  %v729 = vadd.f32 %v645, %v728
  %v730 = vpop.f32.mrb[0].mxu0
  %731 = vmatprep.mubr.f32.mxu0 0.0
  %732 = vmatmul.mubr.f32.gmra.mrb[0].mxu0 %v596
  %v733 = vpop.f32.mrb[0].mxu0
  %v734 = vadd.f32 %v645, %v733
  %v735 = vpop.f32.mrb[0].mxu0
  %736 = vmatprep.mubr.f32.mxu0 0.0
  %737 = vmatmul.mubr.f32.gmra.mrb[0].mxu0 %v597
  %v738 = vpop.f32.mrb[0].mxu0
  %v739 = vadd.f32 %v645, %v738
  %v740 = vpop.f32.mrb[0].mxu0
  %741 = vmatprep.mubr.f32.mxu0 0.0
  %742 = vmatmul.mubr.f32.gmra.mrb[0].mxu0 %v598
  %v743 = vpop.f32.mrb[0].mxu0
  %v744 = vadd.f32 %v645, %v743
  %v745 = vpop.f32.mrb[0].mxu0
  %746 = vmatprep.mubr.f32.mxu0 0.0
  %747 = vmatmul.mubr.f32.gmra.mrb[0].mxu0 %v599
  %v748 = vpop.f32.mrb[0].mxu0
  %v749 = vadd.f32 %v645, %v748
  %v750 = vpop.f32.mrb[0].mxu0
  %751 = vmatprep.mubr.f32.mxu0 0.0
  %752 = vmatmul.mubr.f32.gmra.mrb[0].mxu0 %v600
  %v753 = vpop.f32.mrb[0].mxu0
  %v754 = vadd.f32 %v645, %v753
  %v755 = vpop.f32.mrb[0].mxu0
  %756 = vmatprep.mubr.f32.mxu0 0.0
  %757 = vmatmul.mubr.f32.gmra.mrb[0].mxu0 %v601
  %v758 = vpop.f32.mrb[0].mxu0
  %v759 = vadd.f32 %v645, %v758
  %v760 = vpop.f32.mrb[0].mxu0
  %761 = vmatprep.mubr.f32.mxu0 0.0
  %762 = vmatmul.mubr.f32.gmra.mrb[0].mxu0 %v602
  %v763 = vpop.f32.mrb[0].mxu0
  %v764 = vadd.f32 %v645, %v763
  %v765 = vpop.f32.mrb[0].mxu0
  %766 = vmatprep.mubr.f32.mxu0 0.0
  %767 = vmatmul.mubr.f32.gmra.mrb[0].mxu0 %v603
  %v768 = vpop.f32.mrb[0].mxu0
  %v769 = vadd.f32 %v645, %v768
  %v770 = vpop.f32.mrb[0].mxu0
  %771 = vmatprep.mubr.f32.mxu0 0.0
  %772 = vmatmul.mubr.f32.gmra.mrb[0].mxu0 %v604
  %v773 = vpop.f32.mrb[0].mxu0
  %v774 = vadd.f32 %v645, %v773
  %v775 = vpop.f32.mrb[0].mxu0
  %776 = vmatprep.mubr.f32.mxu0 0.0
  %777 = vmatmul.mubr.f32.gmra.mrb[0].mxu0 %v605
  %v778 = vpop.f32.mrb[0].mxu0
  %v779 = vadd.f32 %v645, %v778
  %v780 = vpop.f32.mrb[0].mxu0
  %781 = vmatprep.mubr.f32.mxu0 0.0
  %782 = vmatmul.mubr.f32.gmra.mrb[0].mxu0 %v606
  %v783 = vpop.f32.mrb[0].mxu0
  %v784 = vadd.f32 %v645, %v783
  %v785 = vpop.f32.mrb[0].mxu0
  %786 = vmatprep.mubr.f32.mxu0 0.0
  %787 = vmatmul.mubr.f32.gmra.mrb[0].mxu0 %v607
  %v788 = vpop.f32.mrb[0].mxu0
  %v789 = vadd.f32 %v645, %v788
  %v790 = vpop.f32.mrb[0].mxu0
  %791 = vmatprep.mubr.f32.mxu0 0.0
  %792 = vmatmul.mubr.f32.gmra.mrb[0].mxu0 %v608
  %v793 = vpop.f32.mrb[0].mxu0
  %v794 = vadd.f32 %v645, %v793
  %v795 = vpop.f32.mrb[0].mxu0
  %796 = vmatprep.mubr.f32.mxu0 0.0
  %797 = vmatmul.mubr.f32.gmra.mrb[0].mxu0 %v609
  %v798 = vpop.f32.mrb[0].mxu0
  %v799 = vadd.f32 %v645, %v798
  %v800 = vpop.f32.mrb[0].mxu0
  %801 = vmatprep.mubr.f32.mxu0 0.0
  %802 = vmatmul.mubr.f32.gmra.mrb[0].mxu0 %v610
  %v803 = vpop.f32.mrb[0].mxu0
  %v804 = vadd.f32 %v645, %v803
  %v805 = vpop.f32.mrb[0].mxu0
  %806 = vmatprep.mubr.f32.mxu0 0.0
  %807 = vmatmul.mubr.f32.gmra.mrb[0].mxu0 %v611
  %v808 = vpop.f32.mrb[0].mxu0
  %v809 = vadd.f32 %v645, %v808
  %v810 = vpop.f32.mrb[0].mxu0
  %811 = vmatprep.mubr.f32.mxu0 0.0
  %812 = vmatmul.mubr.f32.gmra.mrb[0].mxu0 %v612
  %v813 = vpop.f32.mrb[0].mxu0
  %v814 = vadd.f32 %v645, %v813
  %v815 = vpop.f32.mrb[0].mxu0
  %816 = vmatprep.mubr.f32.mxu0 0.0
  %817 = vmatmul.mubr.f32.gmra.mrb[0].mxu0 %v613
  %v818 = vpop.f32.mrb[0].mxu0
  %v819 = vadd.f32 %v645, %v818
  %v820 = vpop.f32.mrb[0].mxu0
  %821 = vmatprep.mubr.f32.mxu0 0.0
  %822 = vmatmul.mubr.f32.gmra.mrb[0].mxu0 %v614
  %v823 = vpop.f32.mrb[0].mxu0
  %v824 = vadd.f32 %v645, %v823
  %v825 = vpop.f32.mrb[0].mxu0
  %826 = vmatprep.mubr.f32.mxu0 0.0
  %827 = vmatmul.mubr.f32.gmra.mrb[0].mxu0 %v615
  %v828 = vpop.f32.mrb[0].mxu0
  %v829 = vadd.f32 %v645, %v828
  %v830 = vpop.f32.mrb[0].mxu0
  %831 = vmatprep.mubr.f32.mxu0 0.0
  %832 = vmatmul.mubr.f32.gmra.mrb[0].mxu0 %v616
  %v833 = vpop.f32.mrb[0].mxu0
  %v834 = vadd.f32 %v645, %v833
  %v835 = vpop.f32.mrb[0].mxu0
  %836 = vmatprep.mubr.f32.mxu0 0.0
  %837 = vmatmul.mubr.f32.gmra.mrb[0].mxu0 %v617
  %v838 = vpop.f32.mrb[0].mxu0
  %v839 = vadd.f32 %v645, %v838
  %v840 = vpop.f32.mrb[0].mxu0
  %841 = vmatprep.mubr.f32.mxu0 0.0
  %842 = vmatmul.mubr.f32.gmra.mrb[0].mxu0 %v618
  %v843 = vpop.f32.mrb[0].mxu0
  %v844 = vadd.f32 %v645, %v843
  %v845 = vpop.f32.mrb[0].mxu0
  %846 = vmatprep.mubr.f32.mxu0 0.0
  %847 = vmatmul.mubr.f32.gmra.mrb[0].mxu0 %v619
  %v848 = vpop.f32.mrb[0].mxu0
  %v849 = vadd.f32 %v645, %v848
  %v850 = vpop.f32.mrb[0].mxu0
  %851 = vmatprep.mubr.f32.mxu0 0.0
  %852 = vmatmul.mubr.f32.gmra.mrb[0].mxu0 %v620
  %v853 = vpop.f32.mrb[0].mxu0
  %v854 = vadd.f32 %v645, %v853
  %v855 = vpop.f32.mrb[0].mxu0
  %856 = vmatprep.mubr.f32.mxu0 0.0
  %857 = vmatmul.mubr.f32.gmra.mrb[0].mxu0 %v621
  %v858 = vpop.f32.mrb[0].mxu0
  %v859 = vadd.f32 %v645, %v858
  %v860 = vpop.f32.mrb[0].mxu0
  %861 = vmatprep.mubr.f32.mxu0 0.0
  %862 = vmatmul.mubr.f32.gmra.mrb[0].mxu0 %v622
  %v863 = vpop.f32.mrb[0].mxu0
  %v864 = vadd.f32 %v645, %v863
  %v865 = vpop.f32.mrb[0].mxu0
  %866 = vmatprep.mubr.f32.mxu0 0.0
  %867 = vmatmul.mubr.f32.gmra.mrb[0].mxu0 %v623
  %v868 = vpop.f32.mrb[0].mxu0
  %v869 = vadd.f32 %v645, %v868
  %v870 = vpop.f32.mrb[0].mxu0
  %871 = vdwg.mxu0
  %v872 = vmax.f32 %v714, 0.0
  %v873 = vmax.f32 %v719, 0.0
  %v874 = vmax.f32 %v724, 0.0
  %v875 = vmax.f32 %v729, 0.0
  %v876 = vmax.f32 %v734, 0.0
  %v877 = vmax.f32 %v739, 0.0
  %v878 = vmax.f32 %v744, 0.0
  %v879 = vmax.f32 %v749, 0.0
  %v880 = vmax.f32 %v754, 0.0
  %v881 = vmax.f32 %v759, 0.0
  %v882 = vmax.f32 %v764, 0.0
  %v883 = vmax.f32 %v769, 0.0
  %v884 = vmax.f32 %v774, 0.0
  %v885 = vmax.f32 %v779, 0.0
  %v886 = vmax.f32 %v784, 0.0
  %v887 = vmax.f32 %v789, 0.0
  %v888 = vmax.f32 %v794, 0.0
  %v889 = vmax.f32 %v799, 0.0
  %v890 = vmax.f32 %v804, 0.0
  %v891 = vmax.f32 %v809, 0.0
  %v892 = vmax.f32 %v814, 0.0
  %v893 = vmax.f32 %v819, 0.0
  %v894 = vmax.f32 %v824, 0.0
  %v895 = vmax.f32 %v829, 0.0
  %v896 = vmax.f32 %v834, 0.0
  %v897 = vmax.f32 %v839, 0.0
  %v898 = vmax.f32 %v844, 0.0
  %v899 = vmax.f32 %v849, 0.0
  %v900 = vmax.f32 %v854, 0.0
  %v901 = vmax.f32 %v859, 0.0
  %v902 = vmax.f32 %v864, 0.0
  %v903 = vmax.f32 %v869, 0.0
  %v904 = vld [vmem:[%s7] sm:$0xff]
  %v905 = vld [vmem:[%s7 + $0x8] sm:$0xff]
  %v906 = vld [vmem:[%s7 + $0x10] sm:$0xff]
  %v907 = vld [vmem:[%s7 + $0x18] sm:$0xff]
  %v908 = vld [vmem:[%s7 + $0x20] sm:$0xff]
  %v909 = vld [vmem:[%s7 + $0x28] sm:$0xff]
  %v910 = vld [vmem:[%s7 + $0x30] sm:$0xff]
  %v911 = vld [vmem:[%s7 + $0x38] sm:$0xff]
  %v912 = vld [vmem:[%s7 + $0x40] sm:$0xff]
  %v913 = vld [vmem:[%s7 + $0x48] sm:$0xff]
  %v914 = vld [vmem:[%s7 + $0x50] sm:$0xff]
  %v915 = vld [vmem:[%s7 + $0x58] sm:$0xff]
  %v916 = vld [vmem:[%s7 + $0x60] sm:$0xff]
  %v917 = vld [vmem:[%s7 + $0x68] sm:$0xff]
  %v918 = vld [vmem:[%s7 + $0x70] sm:$0xff]
  %v919 = vld [vmem:[%s7 + $0x78] sm:$0xff]
  %v920 = vld [vmem:[%s8] sm:$0x1]
  %v922 = vlaneseq
  %v923 = vshrl.u32 %v922, 7
  %v924 = vsub.s32 0, %v923
  %v925 = vrot.slane %v920, %v924
  %927 = vmatprep.subr.mxu0 0.0
  %928 = vmatpush1.msra.mxu0 %v904
  %929 = vmatprep.subr.mxu0 0.0
  %930 = vmatpush1.msra.mxu0 %v905
  %931 = vmatprep.subr.mxu0 0.0
  %932 = vmatpush1.msra.mxu0 %v906
  %933 = vmatprep.subr.mxu0 0.0
  %934 = vmatpush1.msra.mxu0 %v907
  %935 = vmatprep.subr.mxu0 0.0
  %936 = vmatpush1.msra.mxu0 %v908
  %937 = vmatprep.subr.mxu0 0.0
  %938 = vmatpush1.msra.mxu0 %v909
  %939 = vmatprep.subr.mxu0 0.0
  %940 = vmatpush1.msra.mxu0 %v910
  %941 = vmatprep.subr.mxu0 0.0
  %942 = vmatpush1.msra.mxu0 %v911
  %943 = vmatprep.subr.mxu0 0.0
  %944 = vmatpush1.msra.mxu0 %v912
  %945 = vmatprep.subr.mxu0 0.0
  %946 = vmatpush1.msra.mxu0 %v913
  %947 = vmatprep.subr.mxu0 0.0
  %948 = vmatpush1.msra.mxu0 %v914
  %949 = vmatprep.subr.mxu0 0.0
  %950 = vmatpush1.msra.mxu0 %v915
  %951 = vmatprep.subr.mxu0 0.0
  %952 = vmatpush1.msra.mxu0 %v916
  %953 = vmatprep.subr.mxu0 0.0
  %954 = vmatpush1.msra.mxu0 %v917
  %955 = vmatprep.subr.mxu0 0.0
  %956 = vmatpush1.msra.mxu0 %v918
  %957 = vmatprep.subr.mxu0 0.0
  %958 = vmatpush1.msra.mxu0 %v919
  %959 = vmatprep.subr.mxu0 0.0
  %960 = vmatpush1.msra.mxu0 0.0
  %961 = vmatprep.subr.mxu0 0.0
  %962 = vmatpush1.msra.mxu0 0.0
  %963 = vmatprep.subr.mxu0 0.0
  %964 = vmatpush1.msra.mxu0 0.0
  %965 = vmatprep.subr.mxu0 0.0
  %966 = vmatpush1.msra.mxu0 0.0
  %967 = vmatprep.subr.mxu0 0.0
  %968 = vmatpush1.msra.mxu0 0.0
  %969 = vmatprep.subr.mxu0 0.0
  %970 = vmatpush1.msra.mxu0 0.0
  %971 = vmatprep.subr.mxu0 0.0
  %972 = vmatpush1.msra.mxu0 0.0
  %973 = vmatprep.subr.mxu0 0.0
  %974 = vmatpush1.msra.mxu0 0.0
  %975 = vmatprep.subr.mxu0 0.0
  %976 = vmatpush1.msra.mxu0 0.0
  %977 = vmatprep.subr.mxu0 0.0
  %978 = vmatpush1.msra.mxu0 0.0
  %979 = vmatprep.subr.mxu0 0.0
  %980 = vmatpush1.msra.mxu0 0.0
  %981 = vmatprep.subr.mxu0 0.0
  %982 = vmatpush1.msra.mxu0 0.0
  %983 = vmatprep.subr.mxu0 0.0
  %984 = vmatpush1.msra.mxu0 0.0
  %985 = vmatprep.subr.mxu0 0.0
  %986 = vmatpush1.msra.mxu0 0.0
  %987 = vmatprep.subr.mxu0 0.0
  %988 = vmatpush1.msra.mxu0 0.0
  %989 = vmatprep.subr.mxu0 0.0
  %990 = vmatpush1.msra.mxu0 0.0
  %991 = vmatprep.mubr.f32.mxu0 0.0
  %992 = vmatmul.mubr.f32.gmra.mrb[0].mxu0 %v872
  %v993 = vpop.f32.mrb[0].mxu0
  %v994 = vadd.f32 %v925, %v993
  %v995 = vpop.f32.mrb[0].mxu0
  %996 = vmatprep.mubr.f32.mxu0 0.0
  %997 = vmatmul.mubr.f32.gmra.mrb[0].mxu0 %v873
  %v998 = vpop.f32.mrb[0].mxu0
  %v999 = vadd.f32 %v925, %v998
  %v1000 = vpop.f32.mrb[0].mxu0
  %1001 = vmatprep.mubr.f32.mxu0 0.0
  %1002 = vmatmul.mubr.f32.gmra.mrb[0].mxu0 %v874
  %v1003 = vpop.f32.mrb[0].mxu0
  %v1004 = vadd.f32 %v925, %v1003
  %v1005 = vpop.f32.mrb[0].mxu0
  %1006 = vmatprep.mubr.f32.mxu0 0.0
  %1007 = vmatmul.mubr.f32.gmra.mrb[0].mxu0 %v875
  %v1008 = vpop.f32.mrb[0].mxu0
  %v1009 = vadd.f32 %v925, %v1008
  %v1010 = vpop.f32.mrb[0].mxu0
  %1011 = vmatprep.mubr.f32.mxu0 0.0
  %1012 = vmatmul.mubr.f32.gmra.mrb[0].mxu0 %v876
  %v1013 = vpop.f32.mrb[0].mxu0
  %v1014 = vadd.f32 %v925, %v1013
  %v1015 = vpop.f32.mrb[0].mxu0
  %1016 = vmatprep.mubr.f32.mxu0 0.0
  %1017 = vmatmul.mubr.f32.gmra.mrb[0].mxu0 %v877
  %v1018 = vpop.f32.mrb[0].mxu0
  %v1019 = vadd.f32 %v925, %v1018
  %v1020 = vpop.f32.mrb[0].mxu0
  %1021 = vmatprep.mubr.f32.mxu0 0.0
  %1022 = vmatmul.mubr.f32.gmra.mrb[0].mxu0 %v878
  %v1023 = vpop.f32.mrb[0].mxu0
  %v1024 = vadd.f32 %v925, %v1023
  %v1025 = vpop.f32.mrb[0].mxu0
  %1026 = vmatprep.mubr.f32.mxu0 0.0
  %1027 = vmatmul.mubr.f32.gmra.mrb[0].mxu0 %v879
  %v1028 = vpop.f32.mrb[0].mxu0
  %v1029 = vadd.f32 %v925, %v1028
  %v1030 = vpop.f32.mrb[0].mxu0
  %1031 = vmatprep.mubr.f32.mxu0 0.0
  %1032 = vmatmul.mubr.f32.gmra.mrb[0].mxu0 %v880
  %v1033 = vpop.f32.mrb[0].mxu0
  %v1034 = vadd.f32 %v925, %v1033
  %v1035 = vpop.f32.mrb[0].mxu0
  %1036 = vmatprep.mubr.f32.mxu0 0.0
  %1037 = vmatmul.mubr.f32.gmra.mrb[0].mxu0 %v881
  %v1038 = vpop.f32.mrb[0].mxu0
  %v1039 = vadd.f32 %v925, %v1038
  %v1040 = vpop.f32.mrb[0].mxu0
  %1041 = vmatprep.mubr.f32.mxu0 0.0
  %1042 = vmatmul.mubr.f32.gmra.mrb[0].mxu0 %v882
  %v1043 = vpop.f32.mrb[0].mxu0
  %v1044 = vadd.f32 %v925, %v1043
  %v1045 = vpop.f32.mrb[0].mxu0
  %1046 = vmatprep.mubr.f32.mxu0 0.0
  %1047 = vmatmul.mubr.f32.gmra.mrb[0].mxu0 %v883
  %v1048 = vpop.f32.mrb[0].mxu0
  %v1049 = vadd.f32 %v925, %v1048
  %v1050 = vpop.f32.mrb[0].mxu0
  %1051 = vmatprep.mubr.f32.mxu0 0.0
  %1052 = vmatmul.mubr.f32.gmra.mrb[0].mxu0 %v884
  %v1053 = vpop.f32.mrb[0].mxu0
  %v1054 = vadd.f32 %v925, %v1053
  %v1055 = vpop.f32.mrb[0].mxu0
  %1056 = vmatprep.mubr.f32.mxu0 0.0
  %1057 = vmatmul.mubr.f32.gmra.mrb[0].mxu0 %v885
  %v1058 = vpop.f32.mrb[0].mxu0
  %v1059 = vadd.f32 %v925, %v1058
  %v1060 = vpop.f32.mrb[0].mxu0
  %1061 = vmatprep.mubr.f32.mxu0 0.0
  %1062 = vmatmul.mubr.f32.gmra.mrb[0].mxu0 %v886
  %v1063 = vpop.f32.mrb[0].mxu0
  %v1064 = vadd.f32 %v925, %v1063
  %v1065 = vpop.f32.mrb[0].mxu0
  %1066 = vmatprep.mubr.f32.mxu0 0.0
  %1067 = vmatmul.mubr.f32.gmra.mrb[0].mxu0 %v887
  %v1068 = vpop.f32.mrb[0].mxu0
  %v1069 = vadd.f32 %v925, %v1068
  %v1070 = vpop.f32.mrb[0].mxu0
  %1071 = vmatprep.mubr.f32.mxu0 0.0
  %1072 = vmatmul.mubr.f32.gmra.mrb[0].mxu0 %v888
  %v1073 = vpop.f32.mrb[0].mxu0
  %v1074 = vadd.f32 %v925, %v1073
  %v1075 = vpop.f32.mrb[0].mxu0
  %1076 = vmatprep.mubr.f32.mxu0 0.0
  %1077 = vmatmul.mubr.f32.gmra.mrb[0].mxu0 %v889
  %v1078 = vpop.f32.mrb[0].mxu0
  %v1079 = vadd.f32 %v925, %v1078
  %v1080 = vpop.f32.mrb[0].mxu0
  %1081 = vmatprep.mubr.f32.mxu0 0.0
  %1082 = vmatmul.mubr.f32.gmra.mrb[0].mxu0 %v890
  %v1083 = vpop.f32.mrb[0].mxu0
  %v1084 = vadd.f32 %v925, %v1083
  %v1085 = vpop.f32.mrb[0].mxu0
  %1086 = vmatprep.mubr.f32.mxu0 0.0
  %1087 = vmatmul.mubr.f32.gmra.mrb[0].mxu0 %v891
  %v1088 = vpop.f32.mrb[0].mxu0
  %v1089 = vadd.f32 %v925, %v1088
  %v1090 = vpop.f32.mrb[0].mxu0
  %1091 = vmatprep.mubr.f32.mxu0 0.0
  %1092 = vmatmul.mubr.f32.gmra.mrb[0].mxu0 %v892
  %v1093 = vpop.f32.mrb[0].mxu0
  %v1094 = vadd.f32 %v925, %v1093
  %v1095 = vpop.f32.mrb[0].mxu0
  %1096 = vmatprep.mubr.f32.mxu0 0.0
  %1097 = vmatmul.mubr.f32.gmra.mrb[0].mxu0 %v893
  %v1098 = vpop.f32.mrb[0].mxu0
  %v1099 = vadd.f32 %v925, %v1098
  %v1100 = vpop.f32.mrb[0].mxu0
  %1101 = vmatprep.mubr.f32.mxu0 0.0
  %1102 = vmatmul.mubr.f32.gmra.mrb[0].mxu0 %v894
  %v1103 = vpop.f32.mrb[0].mxu0
  %v1104 = vadd.f32 %v925, %v1103
  %v1105 = vpop.f32.mrb[0].mxu0
  %1106 = vmatprep.mubr.f32.mxu0 0.0
  %1107 = vmatmul.mubr.f32.gmra.mrb[0].mxu0 %v895
  %v1108 = vpop.f32.mrb[0].mxu0
  %v1109 = vadd.f32 %v925, %v1108
  %v1110 = vpop.f32.mrb[0].mxu0
  %1111 = vmatprep.mubr.f32.mxu0 0.0
  %1112 = vmatmul.mubr.f32.gmra.mrb[0].mxu0 %v896
  %v1113 = vpop.f32.mrb[0].mxu0
  %v1114 = vadd.f32 %v925, %v1113
  %v1115 = vpop.f32.mrb[0].mxu0
  %1116 = vmatprep.mubr.f32.mxu0 0.0
  %1117 = vmatmul.mubr.f32.gmra.mrb[0].mxu0 %v897
  %v1118 = vpop.f32.mrb[0].mxu0
  %v1119 = vadd.f32 %v925, %v1118
  %v1120 = vpop.f32.mrb[0].mxu0
  %1121 = vmatprep.mubr.f32.mxu0 0.0
  %1122 = vmatmul.mubr.f32.gmra.mrb[0].mxu0 %v898
  %v1123 = vpop.f32.mrb[0].mxu0
  %v1124 = vadd.f32 %v925, %v1123
  %v1125 = vpop.f32.mrb[0].mxu0
  %1126 = vmatprep.mubr.f32.mxu0 0.0
  %1127 = vmatmul.mubr.f32.gmra.mrb[0].mxu0 %v899
  %v1128 = vpop.f32.mrb[0].mxu0
  %v1129 = vadd.f32 %v925, %v1128
  %v1130 = vpop.f32.mrb[0].mxu0
  %1131 = vmatprep.mubr.f32.mxu0 0.0
  %1132 = vmatmul.mubr.f32.gmra.mrb[0].mxu0 %v900
  %v1133 = vpop.f32.mrb[0].mxu0
  %v1134 = vadd.f32 %v925, %v1133
  %v1135 = vpop.f32.mrb[0].mxu0
  %1136 = vmatprep.mubr.f32.mxu0 0.0
  %1137 = vmatmul.mubr.f32.gmra.mrb[0].mxu0 %v901
  %v1138 = vpop.f32.mrb[0].mxu0
  %v1139 = vadd.f32 %v925, %v1138
  %v1140 = vpop.f32.mrb[0].mxu0
  %1141 = vmatprep.mubr.f32.mxu0 0.0
  %1142 = vmatmul.mubr.f32.gmra.mrb[0].mxu0 %v902
  %v1143 = vpop.f32.mrb[0].mxu0
  %v1144 = vadd.f32 %v925, %v1143
  %v1145 = vpop.f32.mrb[0].mxu0
  %1146 = vmatprep.mubr.f32.mxu0 0.0
  %1147 = vmatmul.mubr.f32.gmra.mrb[0].mxu0 %v903
  %v1148 = vpop.f32.mrb[0].mxu0
  %v1149 = vadd.f32 %v925, %v1148
  %v1150 = vpop.f32.mrb[0].mxu0
  %1151 = vdwg.mxu0
  %1152 = vmax.xlane.f32.xlu0 %v994
  %v1153 = vpop.xlane.xlu0 %1152
  %1154 = vmax.xlane.f32.xlu0 %v999
  %v1155 = vpop.xlane.xlu0 %1154
  %1156 = vmax.xlane.f32.xlu0 %v1004
  %v1157 = vpop.xlane.xlu0 %1156
  %1158 = vmax.xlane.f32.xlu0 %v1009
  %v1159 = vpop.xlane.xlu0 %1158
  %1160 = vmax.xlane.f32.xlu0 %v1014
  %v1161 = vpop.xlane.xlu0 %1160
  %1162 = vmax.xlane.f32.xlu0 %v1019
  %v1163 = vpop.xlane.xlu0 %1162
  %1164 = vmax.xlane.f32.xlu0 %v1024
  %v1165 = vpop.xlane.xlu0 %1164
  %1166 = vmax.xlane.f32.xlu0 %v1029
  %v1167 = vpop.xlane.xlu0 %1166
  %1168 = vmax.xlane.f32.xlu0 %v1034
  %v1169 = vpop.xlane.xlu0 %1168
  %1170 = vmax.xlane.f32.xlu0 %v1039
  %v1171 = vpop.xlane.xlu0 %1170
  %1172 = vmax.xlane.f32.xlu0 %v1044
  %v1173 = vpop.xlane.xlu0 %1172
  %1174 = vmax.xlane.f32.xlu0 %v1049
  %v1175 = vpop.xlane.xlu0 %1174
  %1176 = vmax.xlane.f32.xlu0 %v1054
  %v1177 = vpop.xlane.xlu0 %1176
  %1178 = vmax.xlane.f32.xlu0 %v1059
  %v1179 = vpop.xlane.xlu0 %1178
  %1180 = vmax.xlane.f32.xlu0 %v1064
  %v1181 = vpop.xlane.xlu0 %1180
  %1182 = vmax.xlane.f32.xlu0 %v1069
  %v1183 = vpop.xlane.xlu0 %1182
  %1184 = vmax.xlane.f32.xlu0 %v1074
  %v1185 = vpop.xlane.xlu0 %1184
  %1186 = vmax.xlane.f32.xlu0 %v1079
  %v1187 = vpop.xlane.xlu0 %1186
  %1188 = vmax.xlane.f32.xlu0 %v1084
  %v1189 = vpop.xlane.xlu0 %1188
  %1190 = vmax.xlane.f32.xlu0 %v1089
  %v1191 = vpop.xlane.xlu0 %1190
  %1192 = vmax.xlane.f32.xlu0 %v1094
  %v1193 = vpop.xlane.xlu0 %1192
  %1194 = vmax.xlane.f32.xlu0 %v1099
  %v1195 = vpop.xlane.xlu0 %1194
  %1196 = vmax.xlane.f32.xlu0 %v1104
  %v1197 = vpop.xlane.xlu0 %1196
  %1198 = vmax.xlane.f32.xlu0 %v1109
  %v1199 = vpop.xlane.xlu0 %1198
  %1200 = vmax.xlane.f32.xlu0 %v1114
  %v1201 = vpop.xlane.xlu0 %1200
  %1202 = vmax.xlane.f32.xlu0 %v1119
  %v1203 = vpop.xlane.xlu0 %1202
  %1204 = vmax.xlane.f32.xlu0 %v1124
  %v1205 = vpop.xlane.xlu0 %1204
  %1206 = vmax.xlane.f32.xlu0 %v1129
  %v1207 = vpop.xlane.xlu0 %1206
  %1208 = vmax.xlane.f32.xlu0 %v1134
  %v1209 = vpop.xlane.xlu0 %1208
  %1210 = vmax.xlane.f32.xlu0 %v1139
  %v1211 = vpop.xlane.xlu0 %1210
  %1212 = vmax.xlane.f32.xlu0 %v1144
  %v1213 = vpop.xlane.xlu0 %1212
  %1214 = vmax.xlane.f32.xlu0 %v1149
  %v1215 = vpop.xlane.xlu0 %1214
  %v1216 = vsub.f32 %v994, %v1153
  %v1217 = vsub.f32 %v999, %v1155
  %v1218 = vsub.f32 %v1004, %v1157
  %v1219 = vsub.f32 %v1009, %v1159
  %v1220 = vsub.f32 %v1014, %v1161
  %v1221 = vsub.f32 %v1019, %v1163
  %v1222 = vsub.f32 %v1024, %v1165
  %v1223 = vsub.f32 %v1029, %v1167
  %v1224 = vsub.f32 %v1034, %v1169
  %v1225 = vsub.f32 %v1039, %v1171
  %v1226 = vsub.f32 %v1044, %v1173
  %v1227 = vsub.f32 %v1049, %v1175
  %v1228 = vsub.f32 %v1054, %v1177
  %v1229 = vsub.f32 %v1059, %v1179
  %v1230 = vsub.f32 %v1064, %v1181
  %v1231 = vsub.f32 %v1069, %v1183
  %v1232 = vsub.f32 %v1074, %v1185
  %v1233 = vsub.f32 %v1079, %v1187
  %v1234 = vsub.f32 %v1084, %v1189
  %v1235 = vsub.f32 %v1089, %v1191
  %v1236 = vsub.f32 %v1094, %v1193
  %v1237 = vsub.f32 %v1099, %v1195
  %v1238 = vsub.f32 %v1104, %v1197
  %v1239 = vsub.f32 %v1109, %v1199
  %v1240 = vsub.f32 %v1114, %v1201
  %v1241 = vsub.f32 %v1119, %v1203
  %v1242 = vsub.f32 %v1124, %v1205
  %v1243 = vsub.f32 %v1129, %v1207
  %v1244 = vsub.f32 %v1134, %v1209
  %v1245 = vsub.f32 %v1139, %v1211
  %v1246 = vsub.f32 %v1144, %v1213
  %v1247 = vsub.f32 %v1149, %v1215
  %v1248 = vmul.f32 %v1216, 1.442695
  %v1249 = vpow.pop %v1248
  %v1250 = vmul.f32 %v1217, 1.442695
  %v1251 = vpow.pop %v1250
  %v1252 = vmul.f32 %v1218, 1.442695
  %v1253 = vpow.pop %v1252
  %v1254 = vmul.f32 %v1219, 1.442695
  %v1255 = vpow.pop %v1254
  %v1256 = vmul.f32 %v1220, 1.442695
  %v1257 = vpow.pop %v1256
  %v1258 = vmul.f32 %v1221, 1.442695
  %v1259 = vpow.pop %v1258
  %v1260 = vmul.f32 %v1222, 1.442695
  %v1261 = vpow.pop %v1260
  %v1262 = vmul.f32 %v1223, 1.442695
  %v1263 = vpow.pop %v1262
  %v1264 = vmul.f32 %v1224, 1.442695
  %v1265 = vpow.pop %v1264
  %v1266 = vmul.f32 %v1225, 1.442695
  %v1267 = vpow.pop %v1266
  %v1268 = vmul.f32 %v1226, 1.442695
  %v1269 = vpow.pop %v1268
  %v1270 = vmul.f32 %v1227, 1.442695
  %v1271 = vpow.pop %v1270
  %v1272 = vmul.f32 %v1228, 1.442695
  %v1273 = vpow.pop %v1272
  %v1274 = vmul.f32 %v1229, 1.442695
  %v1275 = vpow.pop %v1274
  %v1276 = vmul.f32 %v1230, 1.442695
  %v1277 = vpow.pop %v1276
  %v1278 = vmul.f32 %v1231, 1.442695
  %v1279 = vpow.pop %v1278
  %v1280 = vmul.f32 %v1232, 1.442695
  %v1281 = vpow.pop %v1280
  %v1282 = vmul.f32 %v1233, 1.442695
  %v1283 = vpow.pop %v1282
  %v1284 = vmul.f32 %v1234, 1.442695
  %v1285 = vpow.pop %v1284
  %v1286 = vmul.f32 %v1235, 1.442695
  %v1287 = vpow.pop %v1286
  %v1288 = vmul.f32 %v1236, 1.442695
  %v1289 = vpow.pop %v1288
  %v1290 = vmul.f32 %v1237, 1.442695
  %v1291 = vpow.pop %v1290
  %v1292 = vmul.f32 %v1238, 1.442695
  %v1293 = vpow.pop %v1292
  %v1294 = vmul.f32 %v1239, 1.442695
  %v1295 = vpow.pop %v1294
  %v1296 = vmul.f32 %v1240, 1.442695
  %v1297 = vpow.pop %v1296
  %v1298 = vmul.f32 %v1241, 1.442695
  %v1299 = vpow.pop %v1298
  %v1300 = vmul.f32 %v1242, 1.442695
  %v1301 = vpow.pop %v1300
  %v1302 = vmul.f32 %v1243, 1.442695
  %v1303 = vpow.pop %v1302
  %v1304 = vmul.f32 %v1244, 1.442695
  %v1305 = vpow.pop %v1304
  %v1306 = vmul.f32 %v1245, 1.442695
  %v1307 = vpow.pop %v1306
  %v1308 = vmul.f32 %v1246, 1.442695
  %v1309 = vpow.pop %v1308
  %v1310 = vmul.f32 %v1247, 1.442695
  %v1311 = vpow.pop %v1310
  %1312 = vadd.xlane.f32.xlu0 %v1249
  %v1313 = vpop.xlane.xlu0 %1312
  %1314 = vadd.xlane.f32.xlu0 %v1251
  %v1315 = vpop.xlane.xlu0 %1314
  %1316 = vadd.xlane.f32.xlu0 %v1253
  %v1317 = vpop.xlane.xlu0 %1316
  %1318 = vadd.xlane.f32.xlu0 %v1255
  %v1319 = vpop.xlane.xlu0 %1318
  %1320 = vadd.xlane.f32.xlu0 %v1257
  %v1321 = vpop.xlane.xlu0 %1320
  %1322 = vadd.xlane.f32.xlu0 %v1259
  %v1323 = vpop.xlane.xlu0 %1322
  %1324 = vadd.xlane.f32.xlu0 %v1261
  %v1325 = vpop.xlane.xlu0 %1324
  %1326 = vadd.xlane.f32.xlu0 %v1263
  %v1327 = vpop.xlane.xlu0 %1326
  %1328 = vadd.xlane.f32.xlu0 %v1265
  %v1329 = vpop.xlane.xlu0 %1328
  %1330 = vadd.xlane.f32.xlu0 %v1267
  %v1331 = vpop.xlane.xlu0 %1330
  %1332 = vadd.xlane.f32.xlu0 %v1269
  %v1333 = vpop.xlane.xlu0 %1332
  %1334 = vadd.xlane.f32.xlu0 %v1271
  %v1335 = vpop.xlane.xlu0 %1334
  %1336 = vadd.xlane.f32.xlu0 %v1273
  %v1337 = vpop.xlane.xlu0 %1336
  %1338 = vadd.xlane.f32.xlu0 %v1275
  %v1339 = vpop.xlane.xlu0 %1338
  %1340 = vadd.xlane.f32.xlu0 %v1277
  %v1341 = vpop.xlane.xlu0 %1340
  %1342 = vadd.xlane.f32.xlu0 %v1279
  %v1343 = vpop.xlane.xlu0 %1342
  %1344 = vadd.xlane.f32.xlu0 %v1281
  %v1345 = vpop.xlane.xlu0 %1344
  %1346 = vadd.xlane.f32.xlu0 %v1283
  %v1347 = vpop.xlane.xlu0 %1346
  %1348 = vadd.xlane.f32.xlu0 %v1285
  %v1349 = vpop.xlane.xlu0 %1348
  %1350 = vadd.xlane.f32.xlu0 %v1287
  %v1351 = vpop.xlane.xlu0 %1350
  %1352 = vadd.xlane.f32.xlu0 %v1289
  %v1353 = vpop.xlane.xlu0 %1352
  %1354 = vadd.xlane.f32.xlu0 %v1291
  %v1355 = vpop.xlane.xlu0 %1354
  %1356 = vadd.xlane.f32.xlu0 %v1293
  %v1357 = vpop.xlane.xlu0 %1356
  %1358 = vadd.xlane.f32.xlu0 %v1295
  %v1359 = vpop.xlane.xlu0 %1358
  %1360 = vadd.xlane.f32.xlu0 %v1297
  %v1361 = vpop.xlane.xlu0 %1360
  %1362 = vadd.xlane.f32.xlu0 %v1299
  %v1363 = vpop.xlane.xlu0 %1362
  %1364 = vadd.xlane.f32.xlu0 %v1301
  %v1365 = vpop.xlane.xlu0 %1364
  %1366 = vadd.xlane.f32.xlu0 %v1303
  %v1367 = vpop.xlane.xlu0 %1366
  %1368 = vadd.xlane.f32.xlu0 %v1305
  %v1369 = vpop.xlane.xlu0 %1368
  %1370 = vadd.xlane.f32.xlu0 %v1307
  %v1371 = vpop.xlane.xlu0 %1370
  %1372 = vadd.xlane.f32.xlu0 %v1309
  %v1373 = vpop.xlane.xlu0 %1372
  %1374 = vadd.xlane.f32.xlu0 %v1311
  %v1375 = vpop.xlane.xlu0 %1374
  %v1376 = vrcp.pop %v1313
  %v1377 = vmul.f32 %v1249, %v1376
  %v1378 = vrcp.pop %v1315
  %v1379 = vmul.f32 %v1251, %v1378
  %v1380 = vrcp.pop %v1317
  %v1381 = vmul.f32 %v1253, %v1380
  %v1382 = vrcp.pop %v1319
  %v1383 = vmul.f32 %v1255, %v1382
  %v1384 = vrcp.pop %v1321
  %v1385 = vmul.f32 %v1257, %v1384
  %v1386 = vrcp.pop %v1323
  %v1387 = vmul.f32 %v1259, %v1386
  %v1388 = vrcp.pop %v1325
  %v1389 = vmul.f32 %v1261, %v1388
  %v1390 = vrcp.pop %v1327
  %v1391 = vmul.f32 %v1263, %v1390
  %v1392 = vrcp.pop %v1329
  %v1393 = vmul.f32 %v1265, %v1392
  %v1394 = vrcp.pop %v1331
  %v1395 = vmul.f32 %v1267, %v1394
  %v1396 = vrcp.pop %v1333
  %v1397 = vmul.f32 %v1269, %v1396
  %v1398 = vrcp.pop %v1335
  %v1399 = vmul.f32 %v1271, %v1398
  %v1400 = vrcp.pop %v1337
  %v1401 = vmul.f32 %v1273, %v1400
  %v1402 = vrcp.pop %v1339
  %v1403 = vmul.f32 %v1275, %v1402
  %v1404 = vrcp.pop %v1341
  %v1405 = vmul.f32 %v1277, %v1404
  %v1406 = vrcp.pop %v1343
  %v1407 = vmul.f32 %v1279, %v1406
  %v1408 = vrcp.pop %v1345
  %v1409 = vmul.f32 %v1281, %v1408
  %v1410 = vrcp.pop %v1347
  %v1411 = vmul.f32 %v1283, %v1410
  %v1412 = vrcp.pop %v1349
  %v1413 = vmul.f32 %v1285, %v1412
  %v1414 = vrcp.pop %v1351
  %v1415 = vmul.f32 %v1287, %v1414
  %v1416 = vrcp.pop %v1353
  %v1417 = vmul.f32 %v1289, %v1416
  %v1418 = vrcp.pop %v1355
  %v1419 = vmul.f32 %v1291, %v1418
  %v1420 = vrcp.pop %v1357
  %v1421 = vmul.f32 %v1293, %v1420
  %v1422 = vrcp.pop %v1359
  %v1423 = vmul.f32 %v1295, %v1422
  %v1424 = vrcp.pop %v1361
  %v1425 = vmul.f32 %v1297, %v1424
  %v1426 = vrcp.pop %v1363
  %v1427 = vmul.f32 %v1299, %v1426
  %v1428 = vrcp.pop %v1365
  %v1429 = vmul.f32 %v1301, %v1428
  %v1430 = vrcp.pop %v1367
  %v1431 = vmul.f32 %v1303, %v1430
  %v1432 = vrcp.pop %v1369
  %v1433 = vmul.f32 %v1305, %v1432
  %v1434 = vrcp.pop %v1371
  %v1435 = vmul.f32 %v1307, %v1434
  %v1436 = vrcp.pop %v1373
  %v1437 = vmul.f32 %v1309, %v1436
  %v1438 = vrcp.pop %v1375
  %v1439 = vmul.f32 %v1311, %v1438
  %1440 = vst [vmem:[%s9] sm:$0xff] %v1377
  %1441 = vst [vmem:[%s9 + $0x8] sm:$0xff] %v1379
  %1442 = vst [vmem:[%s9 + $0x10] sm:$0xff] %v1381
  %1443 = vst [vmem:[%s9 + $0x18] sm:$0xff] %v1383
  %1444 = vst [vmem:[%s9 + $0x20] sm:$0xff] %v1385
  %1445 = vst [vmem:[%s9 + $0x28] sm:$0xff] %v1387
  %1446 = vst [vmem:[%s9 + $0x30] sm:$0xff] %v1389
  %1447 = vst [vmem:[%s9 + $0x38] sm:$0xff] %v1391
  %1448 = vst [vmem:[%s9 + $0x40] sm:$0xff] %v1393
  %1449 = vst [vmem:[%s9 + $0x48] sm:$0xff] %v1395
  %1450 = vst [vmem:[%s9 + $0x50] sm:$0xff] %v1397
  %1451 = vst [vmem:[%s9 + $0x58] sm:$0xff] %v1399
  %1452 = vst [vmem:[%s9 + $0x60] sm:$0xff] %v1401
  %1453 = vst [vmem:[%s9 + $0x68] sm:$0xff] %v1403
  %1454 = vst [vmem:[%s9 + $0x70] sm:$0xff] %v1405
  %1455 = vst [vmem:[%s9 + $0x78] sm:$0xff] %v1407
  %1456 = vst [vmem:[%s9 + $0x80] sm:$0xff] %v1409
  %1457 = vst [vmem:[%s9 + $0x88] sm:$0xff] %v1411
  %1458 = vst [vmem:[%s9 + $0x90] sm:$0xff] %v1413
  %1459 = vst [vmem:[%s9 + $0x98] sm:$0xff] %v1415
  %1460 = vst [vmem:[%s9 + $0xa0] sm:$0xff] %v1417
  %1461 = vst [vmem:[%s9 + $0xa8] sm:$0xff] %v1419
  %1462 = vst [vmem:[%s9 + $0xb0] sm:$0xff] %v1421
  %1463 = vst [vmem:[%s9 + $0xb8] sm:$0xff] %v1423
  %1464 = vst [vmem:[%s9 + $0xc0] sm:$0xff] %v1425
  %1465 = vst [vmem:[%s9 + $0xc8] sm:$0xff] %v1427
  %1466 = vst [vmem:[%s9 + $0xd0] sm:$0xff] %v1429
  %1467 = vst [vmem:[%s9 + $0xd8] sm:$0xff] %v1431
  %1468 = vst [vmem:[%s9 + $0xe0] sm:$0xff] %v1433
  %1469 = vst [vmem:[%s9 + $0xe8] sm:$0xff] %v1435
  %1470 = vst [vmem:[%s9 + $0xf0] sm:$0xff] %v1437
  %1471 = vst [vmem:[%s9 + $0xf8] sm:$0xff] %v1439
  // Predicated region
  $region38: #{_mlp_forward_jit.1} parent=0 // pred_check
    _
  $region39: #{_mlp_forward_jit.1} parent=0 // pred_check_branch
    %1473 = sbr.rel (0) target = $region41
  $region40: #{_mlp_forward_jit.1} parent=0 // pred_region
    _
  $region41: #{_mlp_forward_jit.1} parent=0 // pred_fallthru
    _
  // Predicated region
  $region42: #{_mlp_forward_jit.1} parent=0 // pred_check
    _
  $region43: #{_mlp_forward_jit.1} parent=0 // pred_check_branch
    %1475 = sbr.rel (0) target = $region45
  $region44: #{_mlp_forward_jit.1} parent=0 // pred_region
    _
  $region45: #{_mlp_forward_jit.1} parent=0 // pred_fallthru
    _

</llo_original>
